<compile_context>
chip_gen: v7x
topology: tpu7x:2x2x1
jax: 0.10.0
libtpu: 0.0.40
codegen_flags: <defaults>
</compile_context>

<pallas_src>
import jax
import jax.numpy as jnp
from jax.experimental import pallas as pl
from jax.experimental.pallas import tpu as pltpu

_VMEM_LIMIT_BYTES = 32 * 1024 * 1024


# ----------------------------------------------------------------------------
# helpers
# ----------------------------------------------------------------------------
def _round_up(x, m):
    return (x + m - 1) // m * m


def _pick_row_tile(m, target=1024):
    """Row (M) tile: multiple of 16 (bf16 sublane pack), large to amortize the
    ~0.35us/grid-step overhead, but never a single grid step when M allows two
    (v7x has 2 TensorCores sharded via dimension_semantics=("parallel",))."""
    if m <= 16:
        return 16
    half = _round_up((m + 1) // 2, 16)
    return int(min(target, half))


# ----------------------------------------------------------------------------
# Pallas kernels
# ----------------------------------------------------------------------------
def _conv_relu_pool_kernel(a_ref, w_ref, b_ref, o_ref):
    """Fused conv (im2col matmul) + 2x2 max-pool + bias + ReLU.

    a: (4, Mt, K) bf16  im2col rows, one leading slot per pool-window corner
    w: (K, O)     bf16  weight matrix (true K, true O — no padding)
    b: (1, O)     f32   bias
    o: (Mt, O)    bf16  pooled activations
    """
    w = w_ref[...]
    acc = jnp.dot(a_ref[0], w, preferred_element_type=jnp.float32)
    acc = jnp.maximum(acc, jnp.dot(a_ref[1], w, preferred_element_type=jnp.float32))
    acc = jnp.maximum(acc, jnp.dot(a_ref[2], w, preferred_element_type=jnp.float32))
    acc = jnp.maximum(acc, jnp.dot(a_ref[3], w, preferred_element_type=jnp.float32))
    # pool(relu(conv + b)) == relu(max_corners(conv) + b)  (relu monotone, shared bias)
    o_ref[...] = jnp.maximum(acc + b_ref[...], 0.0).astype(o_ref.dtype)


def _fc_stack_kernel(x_ref, w1_ref, b1_ref, w2_ref, b2_ref, w3_ref, b3_ref, o_ref):
    """Fused fc1(+ReLU) -> fc2(+ReLU) -> fc3; all weights VMEM-resident."""
    h = jnp.dot(x_ref[...], w1_ref[...], preferred_element_type=jnp.float32)
    h = jnp.maximum(h + b1_ref[...], 0.0)
    h = jnp.dot(h.astype(jnp.bfloat16), w2_ref[...], preferred_element_type=jnp.float32)
    h = jnp.maximum(h + b2_ref[...], 0.0)
    h = jnp.dot(h.astype(jnp.bfloat16), w3_ref[...], preferred_element_type=jnp.float32)
    o_ref[...] = h + b3_ref[...]


# ----------------------------------------------------------------------------
# conv layer: lean glue (stacked pool-corner im2col, bf16, no K/O padding)
# ----------------------------------------------------------------------------
# TODO(synk): move patch / pool-corner extraction into the Pallas kernel itself
# (static slices on the NHWC tile) to eliminate this XLA glue entirely; kept
# host-side because stride-2 corner decimation of in-register values does not
# lower cleanly in Mosaic today.
def _im2col_pool_corners(x_nhwc, k):
    """x: (N,H,W,C) bf16 NHWC -> (4, N*OH2*OW2, k*k*C) bf16, one leading slot
    per 2x2 pool-window corner; patch column order is (kh, kw, c)."""
    N, H, W, C = x_nhwc.shape
    OH, OW = H - k + 1, W - k + 1
    OH2, OW2 = OH // 2, OW // 2
    K = k * k * C

    patches = [x_nhwc[:, kh:kh + OH, kw:kw + OW, :]
               for kh in range(k) for kw in range(k)]
    p = jnp.stack(patches, axis=3).reshape(N, OH, OW, K)       # (kh, kw, c) order
    p = p.reshape(N, OH2, 2, OW2, 2, K)
    p = p.transpose(2, 4, 0, 1, 3, 5)                          # (ph, pw, N, OH2, OW2, K)
    return p.reshape(4, N * OH2 * OW2, K), (N, OH2, OW2)


def _conv_weight_matrix(w, b):
    """PyTorch conv weight (O,C,k,k) -> (K,O) bf16 with rows in (kh,kw,c) order;
    bias -> (1,O) f32.  No padding anywhere."""
    O, C, k, _ = w.shape
    wm = w.transpose(2, 3, 1, 0).reshape(k * k * C, O).astype(jnp.bfloat16)
    bm = b.reshape(1, O).astype(jnp.float32)
    return wm, bm


def conv_relu_pool(x_nhwc, w, b):
    """Valid 5x5 conv (stride 1) + bias + ReLU + 2x2/2 max-pool.
    x NHWC bf16 (N,H,W,C) -> pooled NHWC bf16 (N, OH/2, OW/2, O)."""
    O, C, k, _ = w.shape
    K = C * k * k

    corners, (N, OH2, OW2) = _im2col_pool_corners(x_nhwc, k)
    wm, bm = _conv_weight_matrix(w, b)

    M = N * OH2 * OW2
    mt = _pick_row_tile(M)
    m_pad = _round_up(M, mt)
    if m_pad != M:
        corners = jnp.pad(corners, ((0, 0), (0, m_pad - M), (0, 0)))

    out = pl.pallas_call(
        _conv_relu_pool_kernel,
        out_shape=jax.ShapeDtypeStruct((m_pad, O), jnp.bfloat16),
        grid=(m_pad // mt,),
        in_specs=[pl.BlockSpec((4, mt, K), lambda i: (0, i, 0)),
                  pl.BlockSpec((K, O), lambda i: (0, 0)),
                  pl.BlockSpec((1, O), lambda i: (0, 0))],
        out_specs=pl.BlockSpec((mt, O), lambda i: (i, 0)),
        compiler_params=pltpu.CompilerParams(
            dimension_semantics=("parallel",),
            vmem_limit_bytes=_VMEM_LIMIT_BYTES),
    )(corners, wm, bm)

    return out[:M].reshape(N, OH2, OW2, O)


# ----------------------------------------------------------------------------
# fused FC stack (flatten permutation folded into fc1 weight packing)
# ----------------------------------------------------------------------------
def fc_stack(x_flat, params, num_classes):
    """x_flat: (N, 256) bf16 in NHWC (h,w,c) flatten order -> logits (N, ncls) f32."""
    N, D = x_flat.shape

    # fc1 consumes PyTorch's (c,h,w) flatten; permute its input columns to the
    # (h,w,c) order our conv output is already in (one-time, const-folded).
    w1 = params["fc1_w"].reshape(120, 16, 4, 4).transpose(0, 2, 3, 1).reshape(120, 256)
    w1 = w1.T.astype(jnp.bfloat16)                                    # (256, 120)
    b1 = params["fc1_b"].reshape(1, 120).astype(jnp.float32)
    w2 = params["fc2_w"].T.astype(jnp.bfloat16)                       # (120, 84)
    b2 = params["fc2_b"].reshape(1, 84).astype(jnp.float32)
    w3 = params["fc3_w"].T.astype(jnp.bfloat16)                       # (84, ncls)
    b3 = params["fc3_b"].reshape(1, num_classes).astype(jnp.float32)

    nt = _pick_row_tile(N)
    n_pad = _round_up(N, nt)
    xb = x_flat if n_pad == N else jnp.pad(x_flat, ((0, n_pad - N), (0, 0)))

    out = pl.pallas_call(
        _fc_stack_kernel,
        out_shape=jax.ShapeDtypeStruct((n_pad, num_classes), jnp.float32),
        grid=(n_pad // nt,),
        in_specs=[pl.BlockSpec((nt, D), lambda i: (i, 0)),
                  pl.BlockSpec((D, 120), lambda i: (0, 0)),
                  pl.BlockSpec((1, 120), lambda i: (0, 0)),
                  pl.BlockSpec((120, 84), lambda i: (0, 0)),
                  pl.BlockSpec((1, 84), lambda i: (0, 0)),
                  pl.BlockSpec((84, num_classes), lambda i: (0, 0)),
                  pl.BlockSpec((1, num_classes), lambda i: (0, 0))],
        out_specs=pl.BlockSpec((nt, num_classes), lambda i: (i, 0)),
        compiler_params=pltpu.CompilerParams(
            dimension_semantics=("parallel",),
            vmem_limit_bytes=_VMEM_LIMIT_BYTES),
    )(xb, w1, b1, w2, b2, w3, b3)

    return out[:N]


# ----------------------------------------------------------------------------
# LeNet parameters + forward
# ----------------------------------------------------------------------------
def init_lenet_params(key, num_classes=10):
    def uniform(key, shape, fan_in):
        bound = 1.0 / jnp.sqrt(jnp.float32(fan_in))
        return jax.random.uniform(key, shape, jnp.float32, -bound, bound)

    ks = jax.random.split(key, 10)
    return {
        "conv1_w": uniform(ks[0], (6, 1, 5, 5), 1 * 5 * 5),
        "conv1_b": uniform(ks[1], (6,), 1 * 5 * 5),
        "conv2_w": uniform(ks[2], (16, 6, 5, 5), 6 * 5 * 5),
        "conv2_b": uniform(ks[3], (16,), 6 * 5 * 5),
        "fc1_w": uniform(ks[4], (120, 256), 256),
        "fc1_b": uniform(ks[5], (120,), 256),
        "fc2_w": uniform(ks[6], (84, 120), 120),
        "fc2_b": uniform(ks[7], (84,), 120),
        "fc3_w": uniform(ks[8], (num_classes, 84), 84),
        "fc3_b": uniform(ks[9], (num_classes,), 84),
    }


def lenet_forward(params, x):
    # x: (N, 1, 28, 28) float32, NCHW (PyTorch convention at the boundary).
    x = x.transpose(0, 2, 3, 1).astype(jnp.bfloat16)               # NHWC bf16, cast once
    x = conv_relu_pool(x, params["conv1_w"], params["conv1_b"])    # (N, 12, 12, 6) bf16
    x = conv_relu_pool(x, params["conv2_w"], params["conv2_b"])    # (N, 4, 4, 16) bf16
    x = x.reshape(x.shape[0], 4 * 4 * 16)                          # (h,w,c) flatten (see fc_stack)
    num_classes = params["fc3_w"].shape[0]
    return fc_stack(x, params, num_classes)                        # (N, num_classes) f32


if __name__ == "__main__":
    key = jax.random.PRNGKey(0)
    pkey, xkey = jax.random.split(key)
    params = init_lenet_params(pkey, num_classes=10)
    # LeNet's fc1 (16*4*4) implies a 28x28 single-channel input (28->24->12->8->4).
    x = jax.random.normal(xkey, (2, 1, 28, 28), dtype=jnp.float32)
    out = jax.jit(lenet_forward)(params, x)
    out = jax.block_until_ready(out)
    assert out.shape == (2, 10) and out.dtype == jnp.float32
    print("KERNEL_OK")
</pallas_src>

<mosaic_0001>
module attributes {stable_mosaic.version = 11 : i64} {
  func.func @_conv_relu_pool_kernel(%arg0: i32, %arg1: memref<4x144x25xbf16, #tpu.memory_space<vmem>>, %arg2: memref<25x6xbf16, #tpu.memory_space<vmem>>, %arg3: memref<1x6xf32, #tpu.memory_space<vmem>>, %arg4: memref<144x6xbf16, #tpu.memory_space<vmem>>) attributes {dimension_semantics = [#tpu.dimension_semantics<parallel>], iteration_bounds = array<i64: 2>, scalar_prefetch = 0 : i64, scratch_operands = 0 : i64, tpu.core_type = #tpu.core_type<tc>, window_params = [{transform_indices = @transform_0, window_bounds = array<i64: 4, 144, 25>}, {pipeline_mode = #tpu.pipeline_mode<synchronous>, transform_indices = @transform_1, window_bounds = array<i64: 25, 6>}, {pipeline_mode = #tpu.pipeline_mode<synchronous>, transform_indices = @transform_2, window_bounds = array<i64: 1, 6>}, {transform_indices = @transform_3, window_bounds = array<i64: 144, 6>}]} {
    %c0 = arith.constant 0 : index
    %c0_0 = arith.constant 0 : index
    %0 = vector.load %arg2[%c0, %c0_0] : memref<25x6xbf16, #tpu.memory_space<vmem>>, vector<25x6xbf16>
    %c0_1 = arith.constant 0 : index
    %c0_2 = arith.constant 0 : index
    %c0_3 = arith.constant 0 : index
    %1 = vector.load %arg1[%c0_1, %c0_2, %c0_3] : memref<4x144x25xbf16, #tpu.memory_space<vmem>>, vector<1x144x25xbf16>
    %2 = vector.shape_cast %1 : vector<1x144x25xbf16> to vector<144x25xbf16>
    %cst = arith.constant dense<0.000000e+00> : vector<144x6xf32>
    %3 = tpu.matmul %2, %0, %cst {dimension_numbers = #tpu.dot_dimension_numbers<[1], [0], [0], [1], [0, 0, 1, 1], [], []>} : vector<144x25xbf16>, vector<25x6xbf16>, vector<144x6xf32> -> vector<144x6xf32>
    %c1 = arith.constant 1 : index
    %c0_4 = arith.constant 0 : index
    %c0_5 = arith.constant 0 : index
    %4 = vector.load %arg1[%c1, %c0_4, %c0_5] : memref<4x144x25xbf16, #tpu.memory_space<vmem>>, vector<1x144x25xbf16>
    %5 = vector.shape_cast %4 : vector<1x144x25xbf16> to vector<144x25xbf16>
    %cst_6 = arith.constant dense<0.000000e+00> : vector<144x6xf32>
    %6 = tpu.matmul %5, %0, %cst_6 {dimension_numbers = #tpu.dot_dimension_numbers<[1], [0], [0], [1], [0, 0, 1, 1], [], []>} : vector<144x25xbf16>, vector<25x6xbf16>, vector<144x6xf32> -> vector<144x6xf32>
    %7 = arith.maximumf %3, %6 : vector<144x6xf32>
    %c2 = arith.constant 2 : index
    %c0_7 = arith.constant 0 : index
    %c0_8 = arith.constant 0 : index
    %8 = vector.load %arg1[%c2, %c0_7, %c0_8] : memref<4x144x25xbf16, #tpu.memory_space<vmem>>, vector<1x144x25xbf16>
    %9 = vector.shape_cast %8 : vector<1x144x25xbf16> to vector<144x25xbf16>
    %cst_9 = arith.constant dense<0.000000e+00> : vector<144x6xf32>
    %10 = tpu.matmul %9, %0, %cst_9 {dimension_numbers = #tpu.dot_dimension_numbers<[1], [0], [0], [1], [0, 0, 1, 1], [], []>} : vector<144x25xbf16>, vector<25x6xbf16>, vector<144x6xf32> -> vector<144x6xf32>
    %11 = arith.maximumf %7, %10 : vector<144x6xf32>
    %c3 = arith.constant 3 : index
    %c0_10 = arith.constant 0 : index
    %c0_11 = arith.constant 0 : index
    %12 = vector.load %arg1[%c3, %c0_10, %c0_11] : memref<4x144x25xbf16, #tpu.memory_space<vmem>>, vector<1x144x25xbf16>
    %13 = vector.shape_cast %12 : vector<1x144x25xbf16> to vector<144x25xbf16>
    %cst_12 = arith.constant dense<0.000000e+00> : vector<144x6xf32>
    %14 = tpu.matmul %13, %0, %cst_12 {dimension_numbers = #tpu.dot_dimension_numbers<[1], [0], [0], [1], [0, 0, 1, 1], [], []>} : vector<144x25xbf16>, vector<25x6xbf16>, vector<144x6xf32> -> vector<144x6xf32>
    %15 = arith.maximumf %11, %14 : vector<144x6xf32>
    %c0_13 = arith.constant 0 : index
    %c0_14 = arith.constant 0 : index
    %16 = vector.load %arg3[%c0_13, %c0_14] : memref<1x6xf32, #tpu.memory_space<vmem>>, vector<1x6xf32>
    %17 = vector.broadcast %16 : vector<1x6xf32> to vector<144x6xf32>
    %18 = arith.addf %15, %17 : vector<144x6xf32>
    %cst_15 = arith.constant 0.000000e+00 : f32
    %19 = vector.broadcast %cst_15 : f32 to vector<144x6xf32>
    %20 = arith.maximumf %18, %19 : vector<144x6xf32>
    %21 = arith.truncf %20 : vector<144x6xf32> to vector<144x6xbf16>
    %c0_16 = arith.constant 0 : index
    %c0_17 = arith.constant 0 : index
    %22 = vector.load %arg4[%c0_16, %c0_17] : memref<144x6xbf16, #tpu.memory_space<vmem>>, vector<144x6xbf16>
    tpu.vector_store %arg4[%c0_16, %c0_17], %21 {strides = array<i32>} : memref<144x6xbf16, #tpu.memory_space<vmem>>, vector<144x6xbf16>,
    return
  }
  func.func @transform_0(%arg0: i32) -> (i32, i32, i32) {
    %c0_i32 = arith.constant 0 : i32
    %c0_i32_0 = arith.constant 0 : i32
    %c0_i32_1 = arith.constant 0 : i32
    return %c0_i32, %arg0, %c0_i32_0 : i32, i32, i32
  }
  func.func @transform_1(%arg0: i32) -> (i32, i32) {
    %c0_i32 = arith.constant 0 : i32
    %c0_i32_0 = arith.constant 0 : i32
    %c0_i32_1 = arith.constant 0 : i32
    return %c0_i32, %c0_i32_0 : i32, i32
  }
  func.func @transform_2(%arg0: i32) -> (i32, i32) {
    %c0_i32 = arith.constant 0 : i32
    %c0_i32_0 = arith.constant 0 : i32
    %c0_i32_1 = arith.constant 0 : i32
    return %c0_i32, %c0_i32_0 : i32, i32
  }
  func.func @transform_3(%arg0: i32) -> (i32, i32) {
    %c0_i32 = arith.constant 0 : i32
    %c0_i32_0 = arith.constant 0 : i32
    return %arg0, %c0_i32 : i32, i32
  }
}

module attributes {stable_mosaic.version = 11 : i64} {
  func.func @_conv_relu_pool_kernel(%arg0: i32, %arg1: memref<4x16x150xbf16, #tpu.memory_space<vmem>>, %arg2: memref<150x16xbf16, #tpu.memory_space<vmem>>, %arg3: memref<1x16xf32, #tpu.memory_space<vmem>>, %arg4: memref<16x16xbf16, #tpu.memory_space<vmem>>) attributes {dimension_semantics = [#tpu.dimension_semantics<parallel>], iteration_bounds = array<i64: 2>, scalar_prefetch = 0 : i64, scratch_operands = 0 : i64, tpu.core_type = #tpu.core_type<tc>, window_params = [{transform_indices = @transform_0, window_bounds = array<i64: 4, 16, 150>}, {pipeline_mode = #tpu.pipeline_mode<synchronous>, transform_indices = @transform_1, window_bounds = array<i64: 150, 16>}, {pipeline_mode = #tpu.pipeline_mode<synchronous>, transform_indices = @transform_2, window_bounds = array<i64: 1, 16>}, {transform_indices = @transform_3, window_bounds = array<i64: 16, 16>}]} {
    %c0 = arith.constant 0 : index
    %c0_0 = arith.constant 0 : index
    %0 = vector.load %arg2[%c0, %c0_0] : memref<150x16xbf16, #tpu.memory_space<vmem>>, vector<150x16xbf16>
    %c0_1 = arith.constant 0 : index
    %c0_2 = arith.constant 0 : index
    %c0_3 = arith.constant 0 : index
    %1 = vector.load %arg1[%c0_1, %c0_2, %c0_3] : memref<4x16x150xbf16, #tpu.memory_space<vmem>>, vector<1x16x150xbf16>
    %2 = vector.shape_cast %1 : vector<1x16x150xbf16> to vector<16x150xbf16>
    %cst = arith.constant dense<0.000000e+00> : vector<16x16xf32>
    %3 = tpu.matmul %2, %0, %cst {dimension_numbers = #tpu.dot_dimension_numbers<[1], [0], [0], [1], [0, 0, 1, 1], [], []>} : vector<16x150xbf16>, vector<150x16xbf16>, vector<16x16xf32> -> vector<16x16xf32>
    %c1 = arith.constant 1 : index
    %c0_4 = arith.constant 0 : index
    %c0_5 = arith.constant 0 : index
    %4 = vector.load %arg1[%c1, %c0_4, %c0_5] : memref<4x16x150xbf16, #tpu.memory_space<vmem>>, vector<1x16x150xbf16>
    %5 = vector.shape_cast %4 : vector<1x16x150xbf16> to vector<16x150xbf16>
    %cst_6 = arith.constant dense<0.000000e+00> : vector<16x16xf32>
    %6 = tpu.matmul %5, %0, %cst_6 {dimension_numbers = #tpu.dot_dimension_numbers<[1], [0], [0], [1], [0, 0, 1, 1], [], []>} : vector<16x150xbf16>, vector<150x16xbf16>, vector<16x16xf32> -> vector<16x16xf32>
    %7 = arith.maximumf %3, %6 : vector<16x16xf32>
    %c2 = arith.constant 2 : index
    %c0_7 = arith.constant 0 : index
    %c0_8 = arith.constant 0 : index
    %8 = vector.load %arg1[%c2, %c0_7, %c0_8] : memref<4x16x150xbf16, #tpu.memory_space<vmem>>, vector<1x16x150xbf16>
    %9 = vector.shape_cast %8 : vector<1x16x150xbf16> to vector<16x150xbf16>
    %cst_9 = arith.constant dense<0.000000e+00> : vector<16x16xf32>
    %10 = tpu.matmul %9, %0, %cst_9 {dimension_numbers = #tpu.dot_dimension_numbers<[1], [0], [0], [1], [0, 0, 1, 1], [], []>} : vector<16x150xbf16>, vector<150x16xbf16>, vector<16x16xf32> -> vector<16x16xf32>
    %11 = arith.maximumf %7, %10 : vector<16x16xf32>
    %c3 = arith.constant 3 : index
    %c0_10 = arith.constant 0 : index
    %c0_11 = arith.constant 0 : index
    %12 = vector.load %arg1[%c3, %c0_10, %c0_11] : memref<4x16x150xbf16, #tpu.memory_space<vmem>>, vector<1x16x150xbf16>
    %13 = vector.shape_cast %12 : vector<1x16x150xbf16> to vector<16x150xbf16>
    %cst_12 = arith.constant dense<0.000000e+00> : vector<16x16xf32>
    %14 = tpu.matmul %13, %0, %cst_12 {dimension_numbers = #tpu.dot_dimension_numbers<[1], [0], [0], [1], [0, 0, 1, 1], [], []>} : vector<16x150xbf16>, vector<150x16xbf16>, vector<16x16xf32> -> vector<16x16xf32>
    %15 = arith.maximumf %11, %14 : vector<16x16xf32>
    %c0_13 = arith.constant 0 : index
    %c0_14 = arith.constant 0 : index
    %16 = vector.load %arg3[%c0_13, %c0_14] : memref<1x16xf32, #tpu.memory_space<vmem>>, vector<1x16xf32>
    %17 = vector.broadcast %16 : vector<1x16xf32> to vector<16x16xf32>
    %18 = arith.addf %15, %17 : vector<16x16xf32>
    %cst_15 = arith.constant 0.000000e+00 : f32
    %19 = vector.broadcast %cst_15 : f32 to vector<16x16xf32>
    %20 = arith.maximumf %18, %19 : vector<16x16xf32>
    %21 = arith.truncf %20 : vector<16x16xf32> to vector<16x16xbf16>
    %c0_16 = arith.constant 0 : index
    %c0_17 = arith.constant 0 : index
    %22 = vector.load %arg4[%c0_16, %c0_17] : memref<16x16xbf16, #tpu.memory_space<vmem>>, vector<16x16xbf16>
    tpu.vector_store %arg4[%c0_16, %c0_17], %21 {strides = array<i32>} : memref<16x16xbf16, #tpu.memory_space<vmem>>, vector<16x16xbf16>,
    return
  }
  func.func @transform_0(%arg0: i32) -> (i32, i32, i32) {
    %c0_i32 = arith.constant 0 : i32
    %c0_i32_0 = arith.constant 0 : i32
    %c0_i32_1 = arith.constant 0 : i32
    return %c0_i32, %arg0, %c0_i32_0 : i32, i32, i32
  }
  func.func @transform_1(%arg0: i32) -> (i32, i32) {
    %c0_i32 = arith.constant 0 : i32
    %c0_i32_0 = arith.constant 0 : i32
    %c0_i32_1 = arith.constant 0 : i32
    return %c0_i32, %c0_i32_0 : i32, i32
  }
  func.func @transform_2(%arg0: i32) -> (i32, i32) {
    %c0_i32 = arith.constant 0 : i32
    %c0_i32_0 = arith.constant 0 : i32
    %c0_i32_1 = arith.constant 0 : i32
    return %c0_i32, %c0_i32_0 : i32, i32
  }
  func.func @transform_3(%arg0: i32) -> (i32, i32) {
    %c0_i32 = arith.constant 0 : i32
    %c0_i32_0 = arith.constant 0 : i32
    return %arg0, %c0_i32 : i32, i32
  }
}

module attributes {stable_mosaic.version = 11 : i64} {
  func.func @_fc_stack_kernel(%arg0: i32, %arg1: memref<16x256xbf16, #tpu.memory_space<vmem>>, %arg2: memref<256x120xbf16, #tpu.memory_space<vmem>>, %arg3: memref<1x120xf32, #tpu.memory_space<vmem>>, %arg4: memref<120x84xbf16, #tpu.memory_space<vmem>>, %arg5: memref<1x84xf32, #tpu.memory_space<vmem>>, %arg6: memref<84x10xbf16, #tpu.memory_space<vmem>>, %arg7: memref<1x10xf32, #tpu.memory_space<vmem>>, %arg8: memref<16x10xf32, #tpu.memory_space<vmem>>) attributes {dimension_semantics = [#tpu.dimension_semantics<parallel>], iteration_bounds = array<i64: 1>, scalar_prefetch = 0 : i64, scratch_operands = 0 : i64, tpu.core_type = #tpu.core_type<tc>, window_params = [{transform_indices = @transform_0, window_bounds = array<i64: 16, 256>}, {pipeline_mode = #tpu.pipeline_mode<synchronous>, transform_indices = @transform_1, window_bounds = array<i64: 256, 120>}, {pipeline_mode = #tpu.pipeline_mode<synchronous>, transform_indices = @transform_2, window_bounds = array<i64: 1, 120>}, {pipeline_mode = #tpu.pipeline_mode<synchronous>, transform_indices = @transform_3, window_bounds = array<i64: 120, 84>}, {pipeline_mode = #tpu.pipeline_mode<synchronous>, transform_indices = @transform_4, window_bounds = array<i64: 1, 84>}, {pipeline_mode = #tpu.pipeline_mode<synchronous>, transform_indices = @transform_5, window_bounds = array<i64: 84, 10>}, {pipeline_mode = #tpu.pipeline_mode<synchronous>, transform_indices = @transform_6, window_bounds = array<i64: 1, 10>}, {transform_indices = @transform_7, window_bounds = array<i64: 16, 10>}]} {
    %c0 = arith.constant 0 : index
    %c0_0 = arith.constant 0 : index
    %0 = vector.load %arg1[%c0, %c0_0] : memref<16x256xbf16, #tpu.memory_space<vmem>>, vector<16x256xbf16>
    %c0_1 = arith.constant 0 : index
    %c0_2 = arith.constant 0 : index
    %1 = vector.load %arg2[%c0_1, %c0_2] : memref<256x120xbf16, #tpu.memory_space<vmem>>, vector<256x120xbf16>
    %cst = arith.constant dense<0.000000e+00> : vector<16x120xf32>
    %2 = tpu.matmul %0, %1, %cst {dimension_numbers = #tpu.dot_dimension_numbers<[1], [0], [0], [1], [0, 0, 1, 1], [], []>} : vector<16x256xbf16>, vector<256x120xbf16>, vector<16x120xf32> -> vector<16x120xf32>
    %c0_3 = arith.constant 0 : index
    %c0_4 = arith.constant 0 : index
    %3 = vector.load %arg3[%c0_3, %c0_4] : memref<1x120xf32, #tpu.memory_space<vmem>>, vector<1x120xf32>
    %4 = vector.broadcast %3 : vector<1x120xf32> to vector<16x120xf32>
    %5 = arith.addf %2, %4 : vector<16x120xf32>
    %cst_5 = arith.constant 0.000000e+00 : f32
    %6 = vector.broadcast %cst_5 : f32 to vector<16x120xf32>
    %7 = arith.maximumf %5, %6 : vector<16x120xf32>
    %8 = arith.truncf %7 : vector<16x120xf32> to vector<16x120xbf16>
    %c0_6 = arith.constant 0 : index
    %c0_7 = arith.constant 0 : index
    %9 = vector.load %arg4[%c0_6, %c0_7] : memref<120x84xbf16, #tpu.memory_space<vmem>>, vector<120x84xbf16>
    %cst_8 = arith.constant dense<0.000000e+00> : vector<16x84xf32>
    %10 = tpu.matmul %8, %9, %cst_8 {dimension_numbers = #tpu.dot_dimension_numbers<[1], [0], [0], [1], [0, 0, 1, 1], [], []>} : vector<16x120xbf16>, vector<120x84xbf16>, vector<16x84xf32> -> vector<16x84xf32>
    %c0_9 = arith.constant 0 : index
    %c0_10 = arith.constant 0 : index
    %11 = vector.load %arg5[%c0_9, %c0_10] : memref<1x84xf32, #tpu.memory_space<vmem>>, vector<1x84xf32>
    %12 = vector.broadcast %11 : vector<1x84xf32> to vector<16x84xf32>
    %13 = arith.addf %10, %12 : vector<16x84xf32>
    %cst_11 = arith.constant 0.000000e+00 : f32
    %14 = vector.broadcast %cst_11 : f32 to vector<16x84xf32>
    %15 = arith.maximumf %13, %14 : vector<16x84xf32>
    %16 = arith.truncf %15 : vector<16x84xf32> to vector<16x84xbf16>
    %c0_12 = arith.constant 0 : index
    %c0_13 = arith.constant 0 : index
    %17 = vector.load %arg6[%c0_12, %c0_13] : memref<84x10xbf16, #tpu.memory_space<vmem>>, vector<84x10xbf16>
    %cst_14 = arith.constant dense<0.000000e+00> : vector<16x10xf32>
    %18 = tpu.matmul %16, %17, %cst_14 {dimension_numbers = #tpu.dot_dimension_numbers<[1], [0], [0], [1], [0, 0, 1, 1], [], []>} : vector<16x84xbf16>, vector<84x10xbf16>, vector<16x10xf32> -> vector<16x10xf32>
    %c0_15 = arith.constant 0 : index
    %c0_16 = arith.constant 0 : index
    %19 = vector.load %arg7[%c0_15, %c0_16] : memref<1x10xf32, #tpu.memory_space<vmem>>, vector<1x10xf32>
    %20 = vector.broadcast %19 : vector<1x10xf32> to vector<16x10xf32>
    %21 = arith.addf %18, %20 : vector<16x10xf32>
    %c0_17 = arith.constant 0 : index
    %c0_18 = arith.constant 0 : index
    %22 = vector.load %arg8[%c0_17, %c0_18] : memref<16x10xf32, #tpu.memory_space<vmem>>, vector<16x10xf32>
    tpu.vector_store %arg8[%c0_17, %c0_18], %21 {strides = array<i32>} : memref<16x10xf32, #tpu.memory_space<vmem>>, vector<16x10xf32>,
    return
  }
  func.func @transform_0(%arg0: i32) -> (i32, i32) {
    %c0_i32 = arith.constant 0 : i32
    %c0_i32_0 = arith.constant 0 : i32
    return %arg0, %c0_i32 : i32, i32
  }
  func.func @transform_1(%arg0: i32) -> (i32, i32) {
    %c0_i32 = arith.constant 0 : i32
    %c0_i32_0 = arith.constant 0 : i32
    %c0_i32_1 = arith.constant 0 : i32
    return %c0_i32, %c0_i32_0 : i32, i32
  }
  func.func @transform_2(%arg0: i32) -> (i32, i32) {
    %c0_i32 = arith.constant 0 : i32
    %c0_i32_0 = arith.constant 0 : i32
    %c0_i32_1 = arith.constant 0 : i32
    return %c0_i32, %c0_i32_0 : i32, i32
  }
  func.func @transform_3(%arg0: i32) -> (i32, i32) {
    %c0_i32 = arith.constant 0 : i32
    %c0_i32_0 = arith.constant 0 : i32
    %c0_i32_1 = arith.constant 0 : i32
    return %c0_i32, %c0_i32_0 : i32, i32
  }
  func.func @transform_4(%arg0: i32) -> (i32, i32) {
    %c0_i32 = arith.constant 0 : i32
    %c0_i32_0 = arith.constant 0 : i32
    %c0_i32_1 = arith.constant 0 : i32
    return %c0_i32, %c0_i32_0 : i32, i32
  }
  func.func @transform_5(%arg0: i32) -> (i32, i32) {
    %c0_i32 = arith.constant 0 : i32
    %c0_i32_0 = arith.constant 0 : i32
    %c0_i32_1 = arith.constant 0 : i32
    return %c0_i32, %c0_i32_0 : i32, i32
  }
  func.func @transform_6(%arg0: i32) -> (i32, i32) {
    %c0_i32 = arith.constant 0 : i32
    %c0_i32_0 = arith.constant 0 : i32
    %c0_i32_1 = arith.constant 0 : i32
    return %c0_i32, %c0_i32_0 : i32, i32
  }
  func.func @transform_7(%arg0: i32) -> (i32, i32) {
    %c0_i32 = arith.constant 0 : i32
    %c0_i32_0 = arith.constant 0 : i32
    return %arg0, %c0_i32 : i32, i32
  }
}

</mosaic_0001>

<llo_original>
// kernel: lenet_forward.3
$region0: #{lenet_forward.3}
  #allocation0 [shape = 'u32[]', space=smem, size = 0x4, offset = 0x4, fixed_abs, tag = 'smem constant byte address 0x4 - core index']
  #allocation1 [shape = 'u32[144,128]{1,0:T(1,128)}', space=vmem, size = 0x12000, scoped, tag = 'internal scratch']
  %s0 = inlined_call_operand.vmem [shape: bf16[4,288,25], index: 0, kind: input, shape index: {}]
  %s1 = inlined_call_operand.vmem [shape: bf16[25,6], index: 1, kind: input, shape index: {}]
  %s2 = inlined_call_operand.vmem [shape: f32[1,6], index: 2, kind: input, shape index: {}]
  %s3 = inlined_call_operand.vmem [shape: bf16[288,6], index: 3, kind: output, shape index: {}]
  %s4 = sld [smem:[#allocation0]]
  $region86: #{lenet_forward.3} parent=0
    _
  %s6 = ssub.s32 1, %s4
  %s7 = scalar_select 0, %s6, %s4
  $region1: #{lenet_forward.3} parent=0
    #allocation2 [shape = 'u8[294912]{0}', space=vmem, size = 0x48000, scoped, tag = 'input window, operand 0']
    loop: start=0, step=1, limit=4
    $region2: #{lenet_forward.3} parent=1 // loop_pre_header
      _
    $region3: #{lenet_forward.3} parent=1 // loop_header
      %s9 = sphi 0, %s13
      %p10 = scmp.ge.s32.totalorder %s9, 4
      %s19 = sphi 0, %s21
      %s22 = sphi 0, %s19
      %s23 = sphi 0, %s22
      %s39 = sphi 0, %s23
      %s43 = sphi 0, %s43
      %s45 = sphi 0, %s43
      %s46 = sphi 0, %s45
      %s60 = sphi 0, %s46
      %s64 = sphi 0, %s64
      %s66 = sphi 0, %s64
      %s67 = sphi 0, %s66
      %s81 = sphi 0, %s67
      %s87 = sphi 0, %s89
      %s90 = sphi 0, %s87
      %s91 = sphi 0, %s90
      %s107 = sphi 0, %s91
    $region4: #{lenet_forward.3} parent=1 // loop_header_branch
      %12 = sbr.rel (%p10) target = $region8
    $region5: #{lenet_forward.3} parent=1 // loop_body
      %s14 = ssub.s32 %s9, 1
      %s15 = ssub.s32 %s9, 2
      %s16 = sadd.s32 %s9, 1
      %s17 = ssub.s32 %s9, %s16
      %p18 = scmp.eq.s32.totalorder %s17, 0
      %s20 = sadd.s32 %s19, 1
      %s21 = scalar_select %p18, %s19, %s20
      %p24 = pneg %p18
      %p25 = scmp.eq.s32.totalorder %s9, 1
      %p26 = por %p24, %p25
      %p27 = scmp.ne.s32.totalorder %s19, %s22
      %p28 = scmp.eq.s32.totalorder %s9, 0
      %p29 = por %p27, %p28
      %p30 = scmp.ne.s32.totalorder %s19, %s22
      %p31 = scmp.eq.s32.totalorder %s14, 1
      %p32 = por %p30, %p31
      %p33 = scmp.ne.s32.totalorder %s22, %s23
      %p34 = scmp.eq.s32.totalorder %s14, 0
      %p35 = por %p33, %p34
      %p36 = scmp.ne.s32.totalorder %s22, %s23
      %p37 = scmp.eq.s32.totalorder %s15, 1
      %p38 = por %p36, %p37
      %p40 = scmp.ne.s32.totalorder %s23, %s39
      %p41 = scmp.eq.s32.totalorder %s15, 0
      %p42 = por %p40, %p41
      %s44 = sadd.s32 %s43, 1
      %p47 = scmp.eq.s32.totalorder %s9, 1
      %p48 = scmp.ne.s32.totalorder %s43, %s45
      %p49 = scmp.eq.s32.totalorder %s9, 0
      %p50 = por %p48, %p49
      %p51 = scmp.ne.s32.totalorder %s43, %s45
      %p52 = scmp.eq.s32.totalorder %s14, 1
      %p53 = por %p51, %p52
      %p54 = scmp.ne.s32.totalorder %s45, %s46
      %p55 = scmp.eq.s32.totalorder %s14, 0
      %p56 = por %p54, %p55
      %p57 = scmp.ne.s32.totalorder %s45, %s46
      %p58 = scmp.eq.s32.totalorder %s15, 1
      %p59 = por %p57, %p58
      %p61 = scmp.ne.s32.totalorder %s46, %s60
      %p62 = scmp.eq.s32.totalorder %s15, 0
      %p63 = por %p61, %p62
      %s65 = sadd.s32 %s64, 1
      %p68 = scmp.eq.s32.totalorder %s9, 1
      %p69 = scmp.ne.s32.totalorder %s64, %s66
      %p70 = scmp.eq.s32.totalorder %s9, 0
      %p71 = por %p69, %p70
      %p72 = scmp.ne.s32.totalorder %s64, %s66
      %p73 = scmp.eq.s32.totalorder %s14, 1
      %p74 = por %p72, %p73
      %p75 = scmp.ne.s32.totalorder %s66, %s67
      %p76 = scmp.eq.s32.totalorder %s14, 0
      %p77 = por %p75, %p76
      %p78 = scmp.ne.s32.totalorder %s66, %s67
      %p79 = scmp.eq.s32.totalorder %s15, 1
      %p80 = por %p78, %p79
      %p82 = scmp.ne.s32.totalorder %s67, %s81
      %p83 = scmp.eq.s32.totalorder %s15, 0
      %p84 = por %p82, %p83
      %s85 = ssub.s32 %s9, %s16
      %p86 = scmp.eq.s32.totalorder %s85, 0
      %s88 = sadd.s32 %s87, 1
      %s89 = scalar_select %p86, %s87, %s88
      %p92 = pneg %p86
      %p93 = scmp.eq.s32.totalorder %s9, 1
      %p94 = por %p92, %p93
      %p95 = scmp.ne.s32.totalorder %s87, %s90
      %p96 = scmp.eq.s32.totalorder %s9, 0
      %p97 = por %p95, %p96
      %p98 = scmp.ne.s32.totalorder %s87, %s90
      %p99 = scmp.eq.s32.totalorder %s14, 1
      %p100 = por %p98, %p99
      %p101 = scmp.ne.s32.totalorder %s90, %s91
      %p102 = scmp.eq.s32.totalorder %s14, 0
      %p103 = por %p101, %p102
      %p104 = scmp.ne.s32.totalorder %s90, %s91
      %p105 = scmp.eq.s32.totalorder %s15, 1
      %p106 = por %p104, %p105
      %p108 = scmp.ne.s32.totalorder %s91, %s107
      %p109 = scmp.eq.s32.totalorder %s15, 0
      %p110 = por %p108, %p109
      %p111 = scmp.le.s32.totalorder 1, %s9
      %p112 = scmp.lt.s32.totalorder %s9, 3
      %p113 = pnand %p111, %p112
      %p114 = pneg %p113
      // Predicated region
      $region9: #{lenet_forward.3} parent=5 // pred_check
        _
      $region10: #{lenet_forward.3} parent=5 // pred_check_branch
        %116 = sbr.rel (%p113) target = $region12
      $region11: #{lenet_forward.3} parent=5 // pred_region
        %s117 = ssub.s32 %s9, 1
        // Predicated region
        $region13: #{lenet_forward.3} parent=11 // pred_check
          %p118 = pneg %p56
        $region14: #{lenet_forward.3} parent=11 // pred_check_branch
          %120 = sbr.rel (%p118) target = $region16
        $region15: #{lenet_forward.3} parent=11 // pred_region
          _
        $region16: #{lenet_forward.3} parent=11 // pred_fallthru
          _
        // Predicated region
        $region17: #{lenet_forward.3} parent=11 // pred_check
          %p121 = pneg %p77
        $region18: #{lenet_forward.3} parent=11 // pred_check_branch
          %123 = sbr.rel (%p121) target = $region20
        $region19: #{lenet_forward.3} parent=11 // pred_region
          _
        $region20: #{lenet_forward.3} parent=11 // pred_fallthru
          _
      $region12: #{lenet_forward.3} parent=5 // pred_fallthru
        _
      %p124 = scmp.lt.s32.totalorder %s9, 2
      // Predicated region
      $region21: #{lenet_forward.3} parent=5 // pred_check
        %p125 = pneg %p124
      $region22: #{lenet_forward.3} parent=5 // pred_check_branch
        %127 = sbr.rel (%p125) target = $region24
      $region23: #{lenet_forward.3} parent=5 // pred_region
        // Predicated region
        $region25: #{lenet_forward.3} parent=23 // pred_check
          %p128 = pneg %p29
        $region26: #{lenet_forward.3} parent=23 // pred_check_branch
          %130 = sbr.rel (%p128) target = $region28
        $region27: #{lenet_forward.3} parent=23 // pred_region
          %s131 = sand.u32 %s19, 1
          %s132 = sand.u32 %s19, 1
          %s133 = smul.addr %s132, 288
          %s134 = scalar_lea.vmem [#allocation2], %s133
          %s135 = smul.u32 18, %s9
          %s136 = smul.addr %s135, 4
          %s137 = scalar_lea.vmem %s0, %s136
          // Predicated region
          $region29: #{lenet_forward.3} parent=27 // pred_check
            _
          $region30: #{lenet_forward.3} parent=27 // pred_check_branch
            %139 = sbr.rel (0) target = $region32
          $region31: #{lenet_forward.3} parent=27 // pred_region
            // Predicated region
            $region33: #{lenet_forward.3} parent=31 // pred_check
              _
            $region34: #{lenet_forward.3} parent=31 // pred_check_branch
              %141 = sbr.rel target = $region36
            $region35: #{lenet_forward.3} parent=31 // pred_region
              // Predicated region
              $region48: #{lenet_forward.3} parent=35 // pred_check
                _
              $region49: #{lenet_forward.3} parent=35 // pred_check_branch
                %298 = sbr.rel (0) target = $region51
              $region50: #{lenet_forward.3} parent=35 // pred_region
                loop: start=0, step=1, limit=1
                $region52: #{lenet_forward.3} parent=50 // loop_pre_header
                  _
                $region53: #{lenet_forward.3} parent=50 // loop_header
                  %s300 = sphi 0, %s304
                  %p301 = scmp.ge.s32.totalorder %s300, 1
                  %s305 = sphi %s137, %s137
                  %s306 = sphi %s134, %s134
                $region54: #{lenet_forward.3} parent=50 // loop_header_branch
                  %303 = sbr.rel (%p301) target = $region58
                $region55: #{lenet_forward.3} parent=50 // loop_body
                  _
                $region56: #{lenet_forward.3} parent=50 // loop_footer
                  %s304 = sadd.s32 1, %s300
                $region57: #{lenet_forward.3} parent=50 // loop_footer_branch
                  %299 = sbr.rel target = $region53
                $region58: #{lenet_forward.3} parent=50 // loop_exit
                  _
                loop: start=0, step=1, limit=1
                $region59: #{lenet_forward.3} parent=50 // loop_pre_header
                  _
                $region60: #{lenet_forward.3} parent=50 // loop_header
                  %s309 = sphi 0, %s313
                  %p310 = scmp.ge.s32.totalorder %s309, 1
                  %s314 = sphi %s137, %s137
                  %s315 = sphi %s134, %s134
                $region61: #{lenet_forward.3} parent=50 // loop_header_branch
                  %312 = sbr.rel (%p310) target = $region65
                $region62: #{lenet_forward.3} parent=50 // loop_body
                  %v316 = vld [vmem:[%s314] sm:$0xf]
                  %317 = vst [vmem:[%s315] sm:$0xf] %v316
                  %v318 = vld [vmem:[%s314 + $0x4] sm:$0xf]
                  %319 = vst [vmem:[%s315 + $0x4] sm:$0xf] %v318
                  %v320 = vld [vmem:[%s314 + $0x8] sm:$0xf]
                  %321 = vst [vmem:[%s315 + $0x8] sm:$0xf] %v320
                  %v322 = vld [vmem:[%s314 + $0xc] sm:$0xf]
                  %323 = vst [vmem:[%s315 + $0xc] sm:$0xf] %v322
                  %v324 = vld [vmem:[%s314 + $0x10] sm:$0xf]
                  %325 = vst [vmem:[%s315 + $0x10] sm:$0xf] %v324
                  %v326 = vld [vmem:[%s314 + $0x14] sm:$0xf]
                  %327 = vst [vmem:[%s315 + $0x14] sm:$0xf] %v326
                  %v328 = vld [vmem:[%s314 + $0x18] sm:$0xf]
                  %329 = vst [vmem:[%s315 + $0x18] sm:$0xf] %v328
                  %v330 = vld [vmem:[%s314 + $0x1c] sm:$0xf]
                  %331 = vst [vmem:[%s315 + $0x1c] sm:$0xf] %v330
                  %v332 = vld [vmem:[%s314 + $0x20] sm:$0xf]
                  %333 = vst [vmem:[%s315 + $0x20] sm:$0xf] %v332
                  %v334 = vld [vmem:[%s314 + $0x24] sm:$0xf]
                  %335 = vst [vmem:[%s315 + $0x24] sm:$0xf] %v334
                  %v336 = vld [vmem:[%s314 + $0x28] sm:$0xf]
                  %337 = vst [vmem:[%s315 + $0x28] sm:$0xf] %v336
                  %v338 = vld [vmem:[%s314 + $0x2c] sm:$0xf]
                  %339 = vst [vmem:[%s315 + $0x2c] sm:$0xf] %v338
                  %v340 = vld [vmem:[%s314 + $0x30] sm:$0xf]
                  %341 = vst [vmem:[%s315 + $0x30] sm:$0xf] %v340
                  %v342 = vld [vmem:[%s314 + $0x34] sm:$0xf]
                  %343 = vst [vmem:[%s315 + $0x34] sm:$0xf] %v342
                  %v344 = vld [vmem:[%s314 + $0x38] sm:$0xf]
                  %345 = vst [vmem:[%s315 + $0x38] sm:$0xf] %v344
                  %v346 = vld [vmem:[%s314 + $0x3c] sm:$0xf]
                  %347 = vst [vmem:[%s315 + $0x3c] sm:$0xf] %v346
                  %v348 = vld [vmem:[%s314 + $0x40] sm:$0xf]
                  %349 = vst [vmem:[%s315 + $0x40] sm:$0xf] %v348
                  %v350 = vld [vmem:[%s314 + $0x44] sm:$0xf]
                  %351 = vst [vmem:[%s315 + $0x44] sm:$0xf] %v350
                  %v352 = vld [vmem:[%s314 + $0x90] sm:$0xf]
                  %353 = vst [vmem:[%s315 + $0x48] sm:$0xf] %v352
                  %v354 = vld [vmem:[%s314 + $0x94] sm:$0xf]
                  %355 = vst [vmem:[%s315 + $0x4c] sm:$0xf] %v354
                  %v356 = vld [vmem:[%s314 + $0x98] sm:$0xf]
                  %357 = vst [vmem:[%s315 + $0x50] sm:$0xf] %v356
                  %v358 = vld [vmem:[%s314 + $0x9c] sm:$0xf]
                  %359 = vst [vmem:[%s315 + $0x54] sm:$0xf] %v358
                  %v360 = vld [vmem:[%s314 + $0xa0] sm:$0xf]
                  %361 = vst [vmem:[%s315 + $0x58] sm:$0xf] %v360
                  %v362 = vld [vmem:[%s314 + $0xa4] sm:$0xf]
                  %363 = vst [vmem:[%s315 + $0x5c] sm:$0xf] %v362
                  %v364 = vld [vmem:[%s314 + $0xa8] sm:$0xf]
                  %365 = vst [vmem:[%s315 + $0x60] sm:$0xf] %v364
                  %v366 = vld [vmem:[%s314 + $0xac] sm:$0xf]
                  %367 = vst [vmem:[%s315 + $0x64] sm:$0xf] %v366
                  %v368 = vld [vmem:[%s314 + $0xb0] sm:$0xf]
                  %369 = vst [vmem:[%s315 + $0x68] sm:$0xf] %v368
                  %v370 = vld [vmem:[%s314 + $0xb4] sm:$0xf]
                  %371 = vst [vmem:[%s315 + $0x6c] sm:$0xf] %v370
                  %v372 = vld [vmem:[%s314 + $0xb8] sm:$0xf]
                  %373 = vst [vmem:[%s315 + $0x70] sm:$0xf] %v372
                  %v374 = vld [vmem:[%s314 + $0xbc] sm:$0xf]
                  %375 = vst [vmem:[%s315 + $0x74] sm:$0xf] %v374
                  %v376 = vld [vmem:[%s314 + $0xc0] sm:$0xf]
                  %377 = vst [vmem:[%s315 + $0x78] sm:$0xf] %v376
                  %v378 = vld [vmem:[%s314 + $0xc4] sm:$0xf]
                  %379 = vst [vmem:[%s315 + $0x7c] sm:$0xf] %v378
                  %v380 = vld [vmem:[%s314 + $0xc8] sm:$0xf]
                  %381 = vst [vmem:[%s315 + $0x80] sm:$0xf] %v380
                  %v382 = vld [vmem:[%s314 + $0xcc] sm:$0xf]
                  %383 = vst [vmem:[%s315 + $0x84] sm:$0xf] %v382
                  %v384 = vld [vmem:[%s314 + $0xd0] sm:$0xf]
                  %385 = vst [vmem:[%s315 + $0x88] sm:$0xf] %v384
                  %v386 = vld [vmem:[%s314 + $0xd4] sm:$0xf]
                  %387 = vst [vmem:[%s315 + $0x8c] sm:$0xf] %v386
                  %v388 = vld [vmem:[%s314 + $0x120] sm:$0xf]
                  %389 = vst [vmem:[%s315 + $0x90] sm:$0xf] %v388
                  %v390 = vld [vmem:[%s314 + $0x124] sm:$0xf]
                  %391 = vst [vmem:[%s315 + $0x94] sm:$0xf] %v390
                  %v392 = vld [vmem:[%s314 + $0x128] sm:$0xf]
                  %393 = vst [vmem:[%s315 + $0x98] sm:$0xf] %v392
                  %v394 = vld [vmem:[%s314 + $0x12c] sm:$0xf]
                  %395 = vst [vmem:[%s315 + $0x9c] sm:$0xf] %v394
                  %v396 = vld [vmem:[%s314 + $0x130] sm:$0xf]
                  %397 = vst [vmem:[%s315 + $0xa0] sm:$0xf] %v396
                  %v398 = vld [vmem:[%s314 + $0x134] sm:$0xf]
                  %399 = vst [vmem:[%s315 + $0xa4] sm:$0xf] %v398
                  %v400 = vld [vmem:[%s314 + $0x138] sm:$0xf]
                  %401 = vst [vmem:[%s315 + $0xa8] sm:$0xf] %v400
                  %v402 = vld [vmem:[%s314 + $0x13c] sm:$0xf]
                  %403 = vst [vmem:[%s315 + $0xac] sm:$0xf] %v402
                  %v404 = vld [vmem:[%s314 + $0x140] sm:$0xf]
                  %405 = vst [vmem:[%s315 + $0xb0] sm:$0xf] %v404
                  %v406 = vld [vmem:[%s314 + $0x144] sm:$0xf]
                  %407 = vst [vmem:[%s315 + $0xb4] sm:$0xf] %v406
                  %v408 = vld [vmem:[%s314 + $0x148] sm:$0xf]
                  %409 = vst [vmem:[%s315 + $0xb8] sm:$0xf] %v408
                  %v410 = vld [vmem:[%s314 + $0x14c] sm:$0xf]
                  %411 = vst [vmem:[%s315 + $0xbc] sm:$0xf] %v410
                  %v412 = vld [vmem:[%s314 + $0x150] sm:$0xf]
                  %413 = vst [vmem:[%s315 + $0xc0] sm:$0xf] %v412
                  %v414 = vld [vmem:[%s314 + $0x154] sm:$0xf]
                  %415 = vst [vmem:[%s315 + $0xc4] sm:$0xf] %v414
                  %v416 = vld [vmem:[%s314 + $0x158] sm:$0xf]
                  %417 = vst [vmem:[%s315 + $0xc8] sm:$0xf] %v416
                  %v418 = vld [vmem:[%s314 + $0x15c] sm:$0xf]
                  %419 = vst [vmem:[%s315 + $0xcc] sm:$0xf] %v418
                  %v420 = vld [vmem:[%s314 + $0x160] sm:$0xf]
                  %421 = vst [vmem:[%s315 + $0xd0] sm:$0xf] %v420
                  %v422 = vld [vmem:[%s314 + $0x164] sm:$0xf]
                  %423 = vst [vmem:[%s315 + $0xd4] sm:$0xf] %v422
                  %v424 = vld [vmem:[%s314 + $0x1b0] sm:$0xf]
                  %425 = vst [vmem:[%s315 + $0xd8] sm:$0xf] %v424
                  %v426 = vld [vmem:[%s314 + $0x1b4] sm:$0xf]
                  %427 = vst [vmem:[%s315 + $0xdc] sm:$0xf] %v426
                  %v428 = vld [vmem:[%s314 + $0x1b8] sm:$0xf]
                  %429 = vst [vmem:[%s315 + $0xe0] sm:$0xf] %v428
                  %v430 = vld [vmem:[%s314 + $0x1bc] sm:$0xf]
                  %431 = vst [vmem:[%s315 + $0xe4] sm:$0xf] %v430
                  %v432 = vld [vmem:[%s314 + $0x1c0] sm:$0xf]
                  %433 = vst [vmem:[%s315 + $0xe8] sm:$0xf] %v432
                  %v434 = vld [vmem:[%s314 + $0x1c4] sm:$0xf]
                  %435 = vst [vmem:[%s315 + $0xec] sm:$0xf] %v434
                  %v436 = vld [vmem:[%s314 + $0x1c8] sm:$0xf]
                  %437 = vst [vmem:[%s315 + $0xf0] sm:$0xf] %v436
                  %v438 = vld [vmem:[%s314 + $0x1cc] sm:$0xf]
                  %439 = vst [vmem:[%s315 + $0xf4] sm:$0xf] %v438
                  %v440 = vld [vmem:[%s314 + $0x1d0] sm:$0xf]
                  %441 = vst [vmem:[%s315 + $0xf8] sm:$0xf] %v440
                  %v442 = vld [vmem:[%s314 + $0x1d4] sm:$0xf]
                  %443 = vst [vmem:[%s315 + $0xfc] sm:$0xf] %v442
                  %v444 = vld [vmem:[%s314 + $0x1d8] sm:$0xf]
                  %445 = vst [vmem:[%s315 + $0x100] sm:$0xf] %v444
                  %v446 = vld [vmem:[%s314 + $0x1dc] sm:$0xf]
                  %447 = vst [vmem:[%s315 + $0x104] sm:$0xf] %v446
                  %v448 = vld [vmem:[%s314 + $0x1e0] sm:$0xf]
                  %449 = vst [vmem:[%s315 + $0x108] sm:$0xf] %v448
                  %v450 = vld [vmem:[%s314 + $0x1e4] sm:$0xf]
                  %451 = vst [vmem:[%s315 + $0x10c] sm:$0xf] %v450
                  %v452 = vld [vmem:[%s314 + $0x1e8] sm:$0xf]
                  %453 = vst [vmem:[%s315 + $0x110] sm:$0xf] %v452
                  %v454 = vld [vmem:[%s314 + $0x1ec] sm:$0xf]
                  %455 = vst [vmem:[%s315 + $0x114] sm:$0xf] %v454
                  %v456 = vld [vmem:[%s314 + $0x1f0] sm:$0xf]
                  %457 = vst [vmem:[%s315 + $0x118] sm:$0xf] %v456
                  %v458 = vld [vmem:[%s314 + $0x1f4] sm:$0xf]
                  %459 = vst [vmem:[%s315 + $0x11c] sm:$0xf] %v458
                $region63: #{lenet_forward.3} parent=50 // loop_footer
                  %s313 = sadd.s32 1, %s309
                $region64: #{lenet_forward.3} parent=50 // loop_footer_branch
                  %308 = sbr.rel target = $region60
                $region65: #{lenet_forward.3} parent=50 // loop_exit
                  _
              $region51: #{lenet_forward.3} parent=35 // pred_fallthru
                _
            $region36: #{lenet_forward.3} parent=31 // pred_fallthru
              _
            // Predicated region
            $region37: #{lenet_forward.3} parent=31 // pred_check
              _
            $region38: #{lenet_forward.3} parent=31 // pred_check_branch
              %143 = sbr.rel (0) target = $region40
            $region39: #{lenet_forward.3} parent=31 // pred_region
              loop: start=0, step=1, limit=1
              $region41: #{lenet_forward.3} parent=39 // loop_pre_header
                _
              $region42: #{lenet_forward.3} parent=39 // loop_header
                %s146 = sphi 0, %s150
                %p147 = scmp.ge.s32.totalorder %s146, 1
                %s151 = sphi %s137, %s137
                %s152 = sphi %s134, %s134
              $region43: #{lenet_forward.3} parent=39 // loop_header_branch
                %149 = sbr.rel (%p147) target = $region47
              $region44: #{lenet_forward.3} parent=39 // loop_body
                %v153 = vld [vmem:[%s151] sm:$0xf]
                %154 = vst [vmem:[%s152] sm:$0xf] %v153
                %v155 = vld [vmem:[%s151 + $0x4] sm:$0xf]
                %156 = vst [vmem:[%s152 + $0x4] sm:$0xf] %v155
                %v157 = vld [vmem:[%s151 + $0x8] sm:$0xf]
                %158 = vst [vmem:[%s152 + $0x8] sm:$0xf] %v157
                %v159 = vld [vmem:[%s151 + $0xc] sm:$0xf]
                %160 = vst [vmem:[%s152 + $0xc] sm:$0xf] %v159
                %v161 = vld [vmem:[%s151 + $0x10] sm:$0xf]
                %162 = vst [vmem:[%s152 + $0x10] sm:$0xf] %v161
                %v163 = vld [vmem:[%s151 + $0x14] sm:$0xf]
                %164 = vst [vmem:[%s152 + $0x14] sm:$0xf] %v163
                %v165 = vld [vmem:[%s151 + $0x18] sm:$0xf]
                %166 = vst [vmem:[%s152 + $0x18] sm:$0xf] %v165
                %v167 = vld [vmem:[%s151 + $0x1c] sm:$0xf]
                %168 = vst [vmem:[%s152 + $0x1c] sm:$0xf] %v167
                %v169 = vld [vmem:[%s151 + $0x20] sm:$0xf]
                %170 = vst [vmem:[%s152 + $0x20] sm:$0xf] %v169
                %v171 = vld [vmem:[%s151 + $0x24] sm:$0xf]
                %172 = vst [vmem:[%s152 + $0x24] sm:$0xf] %v171
                %v173 = vld [vmem:[%s151 + $0x28] sm:$0xf]
                %174 = vst [vmem:[%s152 + $0x28] sm:$0xf] %v173
                %v175 = vld [vmem:[%s151 + $0x2c] sm:$0xf]
                %176 = vst [vmem:[%s152 + $0x2c] sm:$0xf] %v175
                %v177 = vld [vmem:[%s151 + $0x30] sm:$0xf]
                %178 = vst [vmem:[%s152 + $0x30] sm:$0xf] %v177
                %v179 = vld [vmem:[%s151 + $0x34] sm:$0xf]
                %180 = vst [vmem:[%s152 + $0x34] sm:$0xf] %v179
                %v181 = vld [vmem:[%s151 + $0x38] sm:$0xf]
                %182 = vst [vmem:[%s152 + $0x38] sm:$0xf] %v181
                %v183 = vld [vmem:[%s151 + $0x3c] sm:$0xf]
                %184 = vst [vmem:[%s152 + $0x3c] sm:$0xf] %v183
                %v185 = vld [vmem:[%s151 + $0x40] sm:$0xf]
                %186 = vst [vmem:[%s152 + $0x40] sm:$0xf] %v185
                %v187 = vld [vmem:[%s151 + $0x44] sm:$0xf]
                %188 = vst [vmem:[%s152 + $0x44] sm:$0xf] %v187
                %v189 = vld [vmem:[%s151 + $0x90] sm:$0xf]
                %190 = vst [vmem:[%s152 + $0x48] sm:$0xf] %v189
                %v191 = vld [vmem:[%s151 + $0x94] sm:$0xf]
                %192 = vst [vmem:[%s152 + $0x4c] sm:$0xf] %v191
                %v193 = vld [vmem:[%s151 + $0x98] sm:$0xf]
                %194 = vst [vmem:[%s152 + $0x50] sm:$0xf] %v193
                %v195 = vld [vmem:[%s151 + $0x9c] sm:$0xf]
                %196 = vst [vmem:[%s152 + $0x54] sm:$0xf] %v195
                %v197 = vld [vmem:[%s151 + $0xa0] sm:$0xf]
                %198 = vst [vmem:[%s152 + $0x58] sm:$0xf] %v197
                %v199 = vld [vmem:[%s151 + $0xa4] sm:$0xf]
                %200 = vst [vmem:[%s152 + $0x5c] sm:$0xf] %v199
                %v201 = vld [vmem:[%s151 + $0xa8] sm:$0xf]
                %202 = vst [vmem:[%s152 + $0x60] sm:$0xf] %v201
                %v203 = vld [vmem:[%s151 + $0xac] sm:$0xf]
                %204 = vst [vmem:[%s152 + $0x64] sm:$0xf] %v203
                %v205 = vld [vmem:[%s151 + $0xb0] sm:$0xf]
                %206 = vst [vmem:[%s152 + $0x68] sm:$0xf] %v205
                %v207 = vld [vmem:[%s151 + $0xb4] sm:$0xf]
                %208 = vst [vmem:[%s152 + $0x6c] sm:$0xf] %v207
                %v209 = vld [vmem:[%s151 + $0xb8] sm:$0xf]
                %210 = vst [vmem:[%s152 + $0x70] sm:$0xf] %v209
                %v211 = vld [vmem:[%s151 + $0xbc] sm:$0xf]
                %212 = vst [vmem:[%s152 + $0x74] sm:$0xf] %v211
                %v213 = vld [vmem:[%s151 + $0xc0] sm:$0xf]
                %214 = vst [vmem:[%s152 + $0x78] sm:$0xf] %v213
                %v215 = vld [vmem:[%s151 + $0xc4] sm:$0xf]
                %216 = vst [vmem:[%s152 + $0x7c] sm:$0xf] %v215
                %v217 = vld [vmem:[%s151 + $0xc8] sm:$0xf]
                %218 = vst [vmem:[%s152 + $0x80] sm:$0xf] %v217
                %v219 = vld [vmem:[%s151 + $0xcc] sm:$0xf]
                %220 = vst [vmem:[%s152 + $0x84] sm:$0xf] %v219
                %v221 = vld [vmem:[%s151 + $0xd0] sm:$0xf]
                %222 = vst [vmem:[%s152 + $0x88] sm:$0xf] %v221
                %v223 = vld [vmem:[%s151 + $0xd4] sm:$0xf]
                %224 = vst [vmem:[%s152 + $0x8c] sm:$0xf] %v223
                %v225 = vld [vmem:[%s151 + $0x120] sm:$0xf]
                %226 = vst [vmem:[%s152 + $0x90] sm:$0xf] %v225
                %v227 = vld [vmem:[%s151 + $0x124] sm:$0xf]
                %228 = vst [vmem:[%s152 + $0x94] sm:$0xf] %v227
                %v229 = vld [vmem:[%s151 + $0x128] sm:$0xf]
                %230 = vst [vmem:[%s152 + $0x98] sm:$0xf] %v229
                %v231 = vld [vmem:[%s151 + $0x12c] sm:$0xf]
                %232 = vst [vmem:[%s152 + $0x9c] sm:$0xf] %v231
                %v233 = vld [vmem:[%s151 + $0x130] sm:$0xf]
                %234 = vst [vmem:[%s152 + $0xa0] sm:$0xf] %v233
                %v235 = vld [vmem:[%s151 + $0x134] sm:$0xf]
                %236 = vst [vmem:[%s152 + $0xa4] sm:$0xf] %v235
                %v237 = vld [vmem:[%s151 + $0x138] sm:$0xf]
                %238 = vst [vmem:[%s152 + $0xa8] sm:$0xf] %v237
                %v239 = vld [vmem:[%s151 + $0x13c] sm:$0xf]
                %240 = vst [vmem:[%s152 + $0xac] sm:$0xf] %v239
                %v241 = vld [vmem:[%s151 + $0x140] sm:$0xf]
                %242 = vst [vmem:[%s152 + $0xb0] sm:$0xf] %v241
                %v243 = vld [vmem:[%s151 + $0x144] sm:$0xf]
                %244 = vst [vmem:[%s152 + $0xb4] sm:$0xf] %v243
                %v245 = vld [vmem:[%s151 + $0x148] sm:$0xf]
                %246 = vst [vmem:[%s152 + $0xb8] sm:$0xf] %v245
                %v247 = vld [vmem:[%s151 + $0x14c] sm:$0xf]
                %248 = vst [vmem:[%s152 + $0xbc] sm:$0xf] %v247
                %v249 = vld [vmem:[%s151 + $0x150] sm:$0xf]
                %250 = vst [vmem:[%s152 + $0xc0] sm:$0xf] %v249
                %v251 = vld [vmem:[%s151 + $0x154] sm:$0xf]
                %252 = vst [vmem:[%s152 + $0xc4] sm:$0xf] %v251
                %v253 = vld [vmem:[%s151 + $0x158] sm:$0xf]
                %254 = vst [vmem:[%s152 + $0xc8] sm:$0xf] %v253
                %v255 = vld [vmem:[%s151 + $0x15c] sm:$0xf]
                %256 = vst [vmem:[%s152 + $0xcc] sm:$0xf] %v255
                %v257 = vld [vmem:[%s151 + $0x160] sm:$0xf]
                %258 = vst [vmem:[%s152 + $0xd0] sm:$0xf] %v257
                %v259 = vld [vmem:[%s151 + $0x164] sm:$0xf]
                %260 = vst [vmem:[%s152 + $0xd4] sm:$0xf] %v259
                %v261 = vld [vmem:[%s151 + $0x1b0] sm:$0xf]
                %262 = vst [vmem:[%s152 + $0xd8] sm:$0xf] %v261
                %v263 = vld [vmem:[%s151 + $0x1b4] sm:$0xf]
                %264 = vst [vmem:[%s152 + $0xdc] sm:$0xf] %v263
                %v265 = vld [vmem:[%s151 + $0x1b8] sm:$0xf]
                %266 = vst [vmem:[%s152 + $0xe0] sm:$0xf] %v265
                %v267 = vld [vmem:[%s151 + $0x1bc] sm:$0xf]
                %268 = vst [vmem:[%s152 + $0xe4] sm:$0xf] %v267
                %v269 = vld [vmem:[%s151 + $0x1c0] sm:$0xf]
                %270 = vst [vmem:[%s152 + $0xe8] sm:$0xf] %v269
                %v271 = vld [vmem:[%s151 + $0x1c4] sm:$0xf]
                %272 = vst [vmem:[%s152 + $0xec] sm:$0xf] %v271
                %v273 = vld [vmem:[%s151 + $0x1c8] sm:$0xf]
                %274 = vst [vmem:[%s152 + $0xf0] sm:$0xf] %v273
                %v275 = vld [vmem:[%s151 + $0x1cc] sm:$0xf]
                %276 = vst [vmem:[%s152 + $0xf4] sm:$0xf] %v275
                %v277 = vld [vmem:[%s151 + $0x1d0] sm:$0xf]
                %278 = vst [vmem:[%s152 + $0xf8] sm:$0xf] %v277
                %v279 = vld [vmem:[%s151 + $0x1d4] sm:$0xf]
                %280 = vst [vmem:[%s152 + $0xfc] sm:$0xf] %v279
                %v281 = vld [vmem:[%s151 + $0x1d8] sm:$0xf]
                %282 = vst [vmem:[%s152 + $0x100] sm:$0xf] %v281
                %v283 = vld [vmem:[%s151 + $0x1dc] sm:$0xf]
                %284 = vst [vmem:[%s152 + $0x104] sm:$0xf] %v283
                %v285 = vld [vmem:[%s151 + $0x1e0] sm:$0xf]
                %286 = vst [vmem:[%s152 + $0x108] sm:$0xf] %v285
                %v287 = vld [vmem:[%s151 + $0x1e4] sm:$0xf]
                %288 = vst [vmem:[%s152 + $0x10c] sm:$0xf] %v287
                %v289 = vld [vmem:[%s151 + $0x1e8] sm:$0xf]
                %290 = vst [vmem:[%s152 + $0x110] sm:$0xf] %v289
                %v291 = vld [vmem:[%s151 + $0x1ec] sm:$0xf]
                %292 = vst [vmem:[%s152 + $0x114] sm:$0xf] %v291
                %v293 = vld [vmem:[%s151 + $0x1f0] sm:$0xf]
                %294 = vst [vmem:[%s152 + $0x118] sm:$0xf] %v293
                %v295 = vld [vmem:[%s151 + $0x1f4] sm:$0xf]
                %296 = vst [vmem:[%s152 + $0x11c] sm:$0xf] %v295
              $region45: #{lenet_forward.3} parent=39 // loop_footer
                %s150 = sadd.s32 1, %s146
              $region46: #{lenet_forward.3} parent=39 // loop_footer_branch
                %145 = sbr.rel target = $region42
              $region47: #{lenet_forward.3} parent=39 // loop_exit
                _
            $region40: #{lenet_forward.3} parent=31 // pred_fallthru
              _
          $region32: #{lenet_forward.3} parent=27 // pred_fallthru
            _
          %460 = vnop
        $region28: #{lenet_forward.3} parent=23 // pred_fallthru
          _
      $region24: #{lenet_forward.3} parent=5 // pred_fallthru
        _
      %p461 = scmp.le.s32.totalorder 1, %s9
      %p462 = scmp.lt.s32.totalorder %s9, 3
      %p463 = pnand %p461, %p462
      %p464 = pneg %p463
      // Predicated region
      $region66: #{lenet_forward.3} parent=5 // pred_check
        _
      $region67: #{lenet_forward.3} parent=5 // pred_check_branch
        %466 = sbr.rel (%p463) target = $region69
      $region68: #{lenet_forward.3} parent=5 // pred_region
        %s467 = ssub.s32 %s9, 1
        %s468 = sand.u32 %s22, 1
        %s469 = sand.u32 %s22, 1
        %s470 = smul.addr %s469, 288
        %s471 = scalar_lea.vmem [#allocation2], %s470
        // Predicated region
        $region70: #{lenet_forward.3} parent=68 // pred_check
          %p472 = pneg %p35
        $region71: #{lenet_forward.3} parent=68 // pred_check_branch
          %474 = sbr.rel (%p472) target = $region73
        $region72: #{lenet_forward.3} parent=68 // pred_region
          _
        $region73: #{lenet_forward.3} parent=68 // pred_fallthru
          _
        %s475 = sand.u32 %s22, 1
        %s476 = sand.u32 %s22, 1
        %s477 = smul.addr %s476, 288
        %s478 = scalar_lea.vmem [#allocation2], %s477
        %p479 = pneg %p35
        %p480 = pneg %p32
        %p481 = pneg %p56
        %p482 = pneg %p53
        %p483 = pneg %p77
        %p484 = pneg %p74
        %p485 = pneg %p103
        %p486 = pneg %p100
        %s487 = smul.u32 18, %s14
        %p488 = scmp.lt.s32.totalorder %s487, 35
        %s489 = scalar_select %p488, %s487, 35
        %s490 = smul.addr %s489, 4
        %s491 = scalar_lea.vmem %s3, %s490
        %s492 = smul.u32 18, %s14
        %s493 = smul.u32 18, %s14
        %p494 = scmp.lt.s32.totalorder %s493, 35
        %s495 = scalar_select %p494, %s493, 35
        %s496 = smul.addr %s495, 4
        %s497 = scalar_lea.vmem %s3, %s496
        %s498 = smul.u32 18, %s14
        %v500 = vld [vmem:[%s1] sm:$0xf]
        %v501 = vld [vmem:[%s1 + $0x4] sm:$0xf]
        %v502 = vld [vmem:[%s1 + $0x8] sm:$0xf]
        %v503 = vld [vmem:[%s1 + $0xc] sm:$0x1]
        %v504 = vld [vmem:[%s471] sm:$0xf]
        %v505 = vld [vmem:[%s471 + $0x4] sm:$0xf]
        %v506 = vld [vmem:[%s471 + $0x8] sm:$0xf]
        %v507 = vld [vmem:[%s471 + $0xc] sm:$0xf]
        %v508 = vld [vmem:[%s471 + $0x10] sm:$0xf]
        %v509 = vld [vmem:[%s471 + $0x14] sm:$0xf]
        %v510 = vld [vmem:[%s471 + $0x18] sm:$0xf]
        %v511 = vld [vmem:[%s471 + $0x1c] sm:$0xf]
        %v512 = vld [vmem:[%s471 + $0x20] sm:$0xf]
        %v513 = vld [vmem:[%s471 + $0x24] sm:$0xf]
        %v514 = vld [vmem:[%s471 + $0x28] sm:$0xf]
        %v515 = vld [vmem:[%s471 + $0x2c] sm:$0xf]
        %v516 = vld [vmem:[%s471 + $0x30] sm:$0xf]
        %v517 = vld [vmem:[%s471 + $0x34] sm:$0xf]
        %v518 = vld [vmem:[%s471 + $0x38] sm:$0xf]
        %v519 = vld [vmem:[%s471 + $0x3c] sm:$0xf]
        %v520 = vld [vmem:[%s471 + $0x40] sm:$0xf]
        %v521 = vld [vmem:[%s471 + $0x44] sm:$0xf]
        %v540 = vunpack.c.l.b16 %v504
        %v541 = vunpack.c.l.b16 %v505
        %v542 = vunpack.c.l.b16 %v506
        %v543 = vunpack.c.l.b16 %v507
        %v544 = vunpack.c.l.b16 %v508
        %v545 = vunpack.c.l.b16 %v509
        %v546 = vunpack.c.l.b16 %v510
        %v547 = vunpack.c.l.b16 %v511
        %v548 = vunpack.c.l.b16 %v512
        %v549 = vunpack.c.l.b16 %v513
        %v550 = vunpack.c.l.b16 %v514
        %v551 = vunpack.c.l.b16 %v515
        %v552 = vunpack.c.l.b16 %v516
        %v553 = vunpack.c.l.b16 %v517
        %v554 = vunpack.c.l.b16 %v518
        %v555 = vunpack.c.l.b16 %v519
        %v556 = vunpack.c.l.b16 %v520
        %v557 = vunpack.c.l.b16 %v521
        %v558 = vpack.c.b16 %v541, %v540
        %v559 = vpack.c.b16 %v543, %v542
        %v560 = vpack.c.b16 %v545, %v544
        %v561 = vpack.c.b16 %v547, %v546
        %v562 = vpack.c.b16 %v549, %v548
        %v563 = vpack.c.b16 %v551, %v550
        %v564 = vpack.c.b16 %v553, %v552
        %v565 = vpack.c.b16 %v555, %v554
        %v566 = vpack.c.b16 %v557, %v556
        %v571 = vunpack.c.l.b16 %v500
        %v572 = vunpack.c.l.b16 %v501
        %v573 = vunpack.c.l.b16 %v502
        %v574 = vunpack.c.l.b16 %v503
        %v575 = vpack.c.b16 %v572, %v571
        %v576 = vpack.c.b16 %v574, %v573
        %vm578 = vcmask 203776
        %v580 = vsel %vm578, %v558, 0
        %v583 = vsel %vm578, %v559, 0
        %v586 = vsel %vm578, %v560, 0
        %v589 = vsel %vm578, %v561, 0
        %v592 = vsel %vm578, %v562, 0
        %v595 = vsel %vm578, %v563, 0
        %v598 = vsel %vm578, %v564, 0
        %v601 = vsel %vm578, %v565, 0
        %v604 = vsel %vm578, %v566, 0
        %vm606 = vcmask 1043456
        %vm607 = vcmask 1044480
        %v608 = vsel %vm606, 4294967295, 65535
        %v609 = vsel %vm607, %v608, 0
        %v611 = vand.u32 %v576, %v609
        %613 = vmatprep.subr.bf16.mxu0 0
        %614 = vmatpush1.bf16.msra.mxu0 %v575
        %615 = vmatprep.subr.bf16.mxu0 0
        %616 = vmatpush1.bf16.msra.mxu0 %v611
        %617 = vmatprep.subr.bf16.mxu0 0
        %618 = vmatpush1.bf16.msra.mxu0 0
        %619 = vmatprep.subr.bf16.mxu0 0
        %620 = vmatpush1.bf16.msra.mxu0 0
        %621 = vmatprep.subr.bf16.mxu0 0
        %622 = vmatpush1.bf16.msra.mxu0 0
        %623 = vmatprep.subr.bf16.mxu0 0
        %624 = vmatpush1.bf16.msra.mxu0 0
        %625 = vmatprep.subr.bf16.mxu0 0
        %626 = vmatpush1.bf16.msra.mxu0 0
        %627 = vmatprep.subr.bf16.mxu0 0
        %628 = vmatpush1.bf16.msra.mxu0 0
        %629 = vmatprep.subr.bf16.mxu0 0
        %630 = vmatpush1.bf16.msra.mxu0 0
        %631 = vmatprep.subr.bf16.mxu0 0
        %632 = vmatpush1.bf16.msra.mxu0 0
        %633 = vmatprep.subr.bf16.mxu0 0
        %634 = vmatpush1.bf16.msra.mxu0 0
        %635 = vmatprep.subr.bf16.mxu0 0
        %636 = vmatpush1.bf16.msra.mxu0 0
        %637 = vmatprep.subr.bf16.mxu0 0
        %638 = vmatpush1.bf16.msra.mxu0 0
        %639 = vmatprep.subr.bf16.mxu0 0
        %640 = vmatpush1.bf16.msra.mxu0 0
        %641 = vmatprep.subr.bf16.mxu0 0
        %642 = vmatpush1.bf16.msra.mxu0 0
        %643 = vmatprep.subr.bf16.mxu0 0
        %644 = vmatpush1.bf16.msra.mxu0 0
        %645 = vmatprep.mubr.bf16.mxu0 0
        %646 = vmatmul.mubr.bf16.gmra.mrb[0].mxu0 %v580
        %v647 = vpop.f32.mrb[0].mxu0
        %v648 = vadd.f32 0.0, %v647
        %v649 = vpop.f32.mrb[0].mxu0
        %v650 = vpop.f32.mrb[0].mxu0
        %v651 = vadd.f32 0.0, %v650
        %v652 = vpop.f32.mrb[0].mxu0
        %653 = vmatprep.mubr.bf16.mxu0 0
        %654 = vmatmul.mubr.bf16.gmra.mrb[0].mxu0 %v583
        %v655 = vpop.f32.mrb[0].mxu0
        %v656 = vadd.f32 0.0, %v655
        %v657 = vpop.f32.mrb[0].mxu0
        %v658 = vpop.f32.mrb[0].mxu0
        %v659 = vadd.f32 0.0, %v658
        %v660 = vpop.f32.mrb[0].mxu0
        %661 = vmatprep.mubr.bf16.mxu0 0
        %662 = vmatmul.mubr.bf16.gmra.mrb[0].mxu0 %v586
        %v663 = vpop.f32.mrb[0].mxu0
        %v664 = vadd.f32 0.0, %v663
        %v665 = vpop.f32.mrb[0].mxu0
        %v666 = vpop.f32.mrb[0].mxu0
        %v667 = vadd.f32 0.0, %v666
        %v668 = vpop.f32.mrb[0].mxu0
        %669 = vmatprep.mubr.bf16.mxu0 0
        %670 = vmatmul.mubr.bf16.gmra.mrb[0].mxu0 %v589
        %v671 = vpop.f32.mrb[0].mxu0
        %v672 = vadd.f32 0.0, %v671
        %v673 = vpop.f32.mrb[0].mxu0
        %v674 = vpop.f32.mrb[0].mxu0
        %v675 = vadd.f32 0.0, %v674
        %v676 = vpop.f32.mrb[0].mxu0
        %677 = vmatprep.mubr.bf16.mxu0 0
        %678 = vmatmul.mubr.bf16.gmra.mrb[0].mxu0 %v592
        %v679 = vpop.f32.mrb[0].mxu0
        %v680 = vadd.f32 0.0, %v679
        %v681 = vpop.f32.mrb[0].mxu0
        %v682 = vpop.f32.mrb[0].mxu0
        %v683 = vadd.f32 0.0, %v682
        %v684 = vpop.f32.mrb[0].mxu0
        %685 = vmatprep.mubr.bf16.mxu0 0
        %686 = vmatmul.mubr.bf16.gmra.mrb[0].mxu0 %v595
        %v687 = vpop.f32.mrb[0].mxu0
        %v688 = vadd.f32 0.0, %v687
        %v689 = vpop.f32.mrb[0].mxu0
        %v690 = vpop.f32.mrb[0].mxu0
        %v691 = vadd.f32 0.0, %v690
        %v692 = vpop.f32.mrb[0].mxu0
        %693 = vmatprep.mubr.bf16.mxu0 0
        %694 = vmatmul.mubr.bf16.gmra.mrb[0].mxu0 %v598
        %v695 = vpop.f32.mrb[0].mxu0
        %v696 = vadd.f32 0.0, %v695
        %v697 = vpop.f32.mrb[0].mxu0
        %v698 = vpop.f32.mrb[0].mxu0
        %v699 = vadd.f32 0.0, %v698
        %v700 = vpop.f32.mrb[0].mxu0
        %701 = vmatprep.mubr.bf16.mxu0 0
        %702 = vmatmul.mubr.bf16.gmra.mrb[0].mxu0 %v601
        %v703 = vpop.f32.mrb[0].mxu0
        %v704 = vadd.f32 0.0, %v703
        %v705 = vpop.f32.mrb[0].mxu0
        %v706 = vpop.f32.mrb[0].mxu0
        %v707 = vadd.f32 0.0, %v706
        %v708 = vpop.f32.mrb[0].mxu0
        %709 = vmatprep.mubr.bf16.mxu0 0
        %710 = vmatmul.mubr.bf16.gmra.mrb[0].mxu0 %v604
        %v711 = vpop.f32.mrb[0].mxu0
        %v712 = vadd.f32 0.0, %v711
        %v713 = vpop.f32.mrb[0].mxu0
        %v714 = vpop.f32.mrb[0].mxu0
        %v715 = vadd.f32 0.0, %v714
        %v716 = vpop.f32.mrb[0].mxu0
        %717 = vdwg.mxu0
        %s718 = scalar_lea.vmem %s471, 72 [#allocation2]
        %v719 = vld [vmem:[%s718] sm:$0xf]
        %v720 = vld [vmem:[%s718 + $0x4] sm:$0xf]
        %v721 = vld [vmem:[%s718 + $0x8] sm:$0xf]
        %v722 = vld [vmem:[%s718 + $0xc] sm:$0xf]
        %v723 = vld [vmem:[%s718 + $0x10] sm:$0xf]
        %v724 = vld [vmem:[%s718 + $0x14] sm:$0xf]
        %v725 = vld [vmem:[%s718 + $0x18] sm:$0xf]
        %v726 = vld [vmem:[%s718 + $0x1c] sm:$0xf]
        %v727 = vld [vmem:[%s718 + $0x20] sm:$0xf]
        %v728 = vld [vmem:[%s718 + $0x24] sm:$0xf]
        %v729 = vld [vmem:[%s718 + $0x28] sm:$0xf]
        %v730 = vld [vmem:[%s718 + $0x2c] sm:$0xf]
        %v731 = vld [vmem:[%s718 + $0x30] sm:$0xf]
        %v732 = vld [vmem:[%s718 + $0x34] sm:$0xf]
        %v733 = vld [vmem:[%s718 + $0x38] sm:$0xf]
        %v734 = vld [vmem:[%s718 + $0x3c] sm:$0xf]
        %v735 = vld [vmem:[%s718 + $0x40] sm:$0xf]
        %v736 = vld [vmem:[%s718 + $0x44] sm:$0xf]
        %v755 = vunpack.c.l.b16 %v719
        %v756 = vunpack.c.l.b16 %v720
        %v757 = vunpack.c.l.b16 %v721
        %v758 = vunpack.c.l.b16 %v722
        %v759 = vunpack.c.l.b16 %v723
        %v760 = vunpack.c.l.b16 %v724
        %v761 = vunpack.c.l.b16 %v725
        %v762 = vunpack.c.l.b16 %v726
        %v763 = vunpack.c.l.b16 %v727
        %v764 = vunpack.c.l.b16 %v728
        %v765 = vunpack.c.l.b16 %v729
        %v766 = vunpack.c.l.b16 %v730
        %v767 = vunpack.c.l.b16 %v731
        %v768 = vunpack.c.l.b16 %v732
        %v769 = vunpack.c.l.b16 %v733
        %v770 = vunpack.c.l.b16 %v734
        %v771 = vunpack.c.l.b16 %v735
        %v772 = vunpack.c.l.b16 %v736
        %v773 = vpack.c.b16 %v756, %v755
        %v774 = vpack.c.b16 %v758, %v757
        %v775 = vpack.c.b16 %v760, %v759
        %v776 = vpack.c.b16 %v762, %v761
        %v777 = vpack.c.b16 %v764, %v763
        %v778 = vpack.c.b16 %v766, %v765
        %v779 = vpack.c.b16 %v768, %v767
        %v780 = vpack.c.b16 %v770, %v769
        %v781 = vpack.c.b16 %v772, %v771
        %v783 = vsel %vm578, %v773, 0
        %v786 = vsel %vm578, %v774, 0
        %v789 = vsel %vm578, %v775, 0
        %v792 = vsel %vm578, %v776, 0
        %v795 = vsel %vm578, %v777, 0
        %v798 = vsel %vm578, %v778, 0
        %v801 = vsel %vm578, %v779, 0
        %v804 = vsel %vm578, %v780, 0
        %v807 = vsel %vm578, %v781, 0
        %809 = vmatprep.subr.bf16.mxu0 0
        %810 = vmatpush1.bf16.msra.mxu0 %v575
        %811 = vmatprep.subr.bf16.mxu0 0
        %812 = vmatpush1.bf16.msra.mxu0 %v611
        %813 = vmatprep.subr.bf16.mxu0 0
        %814 = vmatpush1.bf16.msra.mxu0 0
        %815 = vmatprep.subr.bf16.mxu0 0
        %816 = vmatpush1.bf16.msra.mxu0 0
        %817 = vmatprep.subr.bf16.mxu0 0
        %818 = vmatpush1.bf16.msra.mxu0 0
        %819 = vmatprep.subr.bf16.mxu0 0
        %820 = vmatpush1.bf16.msra.mxu0 0
        %821 = vmatprep.subr.bf16.mxu0 0
        %822 = vmatpush1.bf16.msra.mxu0 0
        %823 = vmatprep.subr.bf16.mxu0 0
        %824 = vmatpush1.bf16.msra.mxu0 0
        %825 = vmatprep.subr.bf16.mxu0 0
        %826 = vmatpush1.bf16.msra.mxu0 0
        %827 = vmatprep.subr.bf16.mxu0 0
        %828 = vmatpush1.bf16.msra.mxu0 0
        %829 = vmatprep.subr.bf16.mxu0 0
        %830 = vmatpush1.bf16.msra.mxu0 0
        %831 = vmatprep.subr.bf16.mxu0 0
        %832 = vmatpush1.bf16.msra.mxu0 0
        %833 = vmatprep.subr.bf16.mxu0 0
        %834 = vmatpush1.bf16.msra.mxu0 0
        %835 = vmatprep.subr.bf16.mxu0 0
        %836 = vmatpush1.bf16.msra.mxu0 0
        %837 = vmatprep.subr.bf16.mxu0 0
        %838 = vmatpush1.bf16.msra.mxu0 0
        %839 = vmatprep.subr.bf16.mxu0 0
        %840 = vmatpush1.bf16.msra.mxu0 0
        %841 = vmatprep.mubr.bf16.mxu0 0
        %842 = vmatmul.mubr.bf16.gmra.mrb[0].mxu0 %v783
        %v843 = vpop.f32.mrb[0].mxu0
        %v844 = vadd.f32 0.0, %v843
        %v845 = vpop.f32.mrb[0].mxu0
        %v846 = vpop.f32.mrb[0].mxu0
        %v847 = vadd.f32 0.0, %v846
        %v848 = vpop.f32.mrb[0].mxu0
        %849 = vmatprep.mubr.bf16.mxu0 0
        %850 = vmatmul.mubr.bf16.gmra.mrb[0].mxu0 %v786
        %v851 = vpop.f32.mrb[0].mxu0
        %v852 = vadd.f32 0.0, %v851
        %v853 = vpop.f32.mrb[0].mxu0
        %v854 = vpop.f32.mrb[0].mxu0
        %v855 = vadd.f32 0.0, %v854
        %v856 = vpop.f32.mrb[0].mxu0
        %857 = vmatprep.mubr.bf16.mxu0 0
        %858 = vmatmul.mubr.bf16.gmra.mrb[0].mxu0 %v789
        %v859 = vpop.f32.mrb[0].mxu0
        %v860 = vadd.f32 0.0, %v859
        %v861 = vpop.f32.mrb[0].mxu0
        %v862 = vpop.f32.mrb[0].mxu0
        %v863 = vadd.f32 0.0, %v862
        %v864 = vpop.f32.mrb[0].mxu0
        %865 = vmatprep.mubr.bf16.mxu0 0
        %866 = vmatmul.mubr.bf16.gmra.mrb[0].mxu0 %v792
        %v867 = vpop.f32.mrb[0].mxu0
        %v868 = vadd.f32 0.0, %v867
        %v869 = vpop.f32.mrb[0].mxu0
        %v870 = vpop.f32.mrb[0].mxu0
        %v871 = vadd.f32 0.0, %v870
        %v872 = vpop.f32.mrb[0].mxu0
        %873 = vmatprep.mubr.bf16.mxu0 0
        %874 = vmatmul.mubr.bf16.gmra.mrb[0].mxu0 %v795
        %v875 = vpop.f32.mrb[0].mxu0
        %v876 = vadd.f32 0.0, %v875
        %v877 = vpop.f32.mrb[0].mxu0
        %v878 = vpop.f32.mrb[0].mxu0
        %v879 = vadd.f32 0.0, %v878
        %v880 = vpop.f32.mrb[0].mxu0
        %881 = vmatprep.mubr.bf16.mxu0 0
        %882 = vmatmul.mubr.bf16.gmra.mrb[0].mxu0 %v798
        %v883 = vpop.f32.mrb[0].mxu0
        %v884 = vadd.f32 0.0, %v883
        %v885 = vpop.f32.mrb[0].mxu0
        %v886 = vpop.f32.mrb[0].mxu0
        %v887 = vadd.f32 0.0, %v886
        %v888 = vpop.f32.mrb[0].mxu0
        %889 = vmatprep.mubr.bf16.mxu0 0
        %890 = vmatmul.mubr.bf16.gmra.mrb[0].mxu0 %v801
        %v891 = vpop.f32.mrb[0].mxu0
        %v892 = vadd.f32 0.0, %v891
        %v893 = vpop.f32.mrb[0].mxu0
        %v894 = vpop.f32.mrb[0].mxu0
        %v895 = vadd.f32 0.0, %v894
        %v896 = vpop.f32.mrb[0].mxu0
        %897 = vmatprep.mubr.bf16.mxu0 0
        %898 = vmatmul.mubr.bf16.gmra.mrb[0].mxu0 %v804
        %v899 = vpop.f32.mrb[0].mxu0
        %v900 = vadd.f32 0.0, %v899
        %v901 = vpop.f32.mrb[0].mxu0
        %v902 = vpop.f32.mrb[0].mxu0
        %v903 = vadd.f32 0.0, %v902
        %v904 = vpop.f32.mrb[0].mxu0
        %905 = vmatprep.mubr.bf16.mxu0 0
        %906 = vmatmul.mubr.bf16.gmra.mrb[0].mxu0 %v807
        %v907 = vpop.f32.mrb[0].mxu0
        %v908 = vadd.f32 0.0, %v907
        %v909 = vpop.f32.mrb[0].mxu0
        %v910 = vpop.f32.mrb[0].mxu0
        %v911 = vadd.f32 0.0, %v910
        %v912 = vpop.f32.mrb[0].mxu0
        %913 = vdwg.mxu0
        %v914 = vmax.f32 %v648, %v844
        %v915 = vmax.f32 %v651, %v847
        %v916 = vmax.f32 %v656, %v852
        %v917 = vmax.f32 %v659, %v855
        %v918 = vmax.f32 %v664, %v860
        %v919 = vmax.f32 %v667, %v863
        %v920 = vmax.f32 %v672, %v868
        %v921 = vmax.f32 %v675, %v871
        %v922 = vmax.f32 %v680, %v876
        %v923 = vmax.f32 %v683, %v879
        %v924 = vmax.f32 %v688, %v884
        %v925 = vmax.f32 %v691, %v887
        %v926 = vmax.f32 %v696, %v892
        %v927 = vmax.f32 %v699, %v895
        %v928 = vmax.f32 %v704, %v900
        %v929 = vmax.f32 %v707, %v903
        %v930 = vmax.f32 %v712, %v908
        %v931 = vmax.f32 %v715, %v911
        %s932 = scalar_lea.vmem %s471, 144 [#allocation2]
        %v933 = vld [vmem:[%s932] sm:$0xf]
        %v934 = vld [vmem:[%s932 + $0x4] sm:$0xf]
        %v935 = vld [vmem:[%s932 + $0x8] sm:$0xf]
        %v936 = vld [vmem:[%s932 + $0xc] sm:$0xf]
        %v937 = vld [vmem:[%s932 + $0x10] sm:$0xf]
        %v938 = vld [vmem:[%s932 + $0x14] sm:$0xf]
        %v939 = vld [vmem:[%s932 + $0x18] sm:$0xf]
        %v940 = vld [vmem:[%s932 + $0x1c] sm:$0xf]
        %v941 = vld [vmem:[%s932 + $0x20] sm:$0xf]
        %v942 = vld [vmem:[%s932 + $0x24] sm:$0xf]
        %v943 = vld [vmem:[%s932 + $0x28] sm:$0xf]
        %v944 = vld [vmem:[%s932 + $0x2c] sm:$0xf]
        %v945 = vld [vmem:[%s932 + $0x30] sm:$0xf]
        %v946 = vld [vmem:[%s932 + $0x34] sm:$0xf]
        %v947 = vld [vmem:[%s932 + $0x38] sm:$0xf]
        %v948 = vld [vmem:[%s932 + $0x3c] sm:$0xf]
        %v949 = vld [vmem:[%s932 + $0x40] sm:$0xf]
        %v950 = vld [vmem:[%s932 + $0x44] sm:$0xf]
        %v969 = vunpack.c.l.b16 %v933
        %v970 = vunpack.c.l.b16 %v934
        %v971 = vunpack.c.l.b16 %v935
        %v972 = vunpack.c.l.b16 %v936
        %v973 = vunpack.c.l.b16 %v937
        %v974 = vunpack.c.l.b16 %v938
        %v975 = vunpack.c.l.b16 %v939
        %v976 = vunpack.c.l.b16 %v940
        %v977 = vunpack.c.l.b16 %v941
        %v978 = vunpack.c.l.b16 %v942
        %v979 = vunpack.c.l.b16 %v943
        %v980 = vunpack.c.l.b16 %v944
        %v981 = vunpack.c.l.b16 %v945
        %v982 = vunpack.c.l.b16 %v946
        %v983 = vunpack.c.l.b16 %v947
        %v984 = vunpack.c.l.b16 %v948
        %v985 = vunpack.c.l.b16 %v949
        %v986 = vunpack.c.l.b16 %v950
        %v987 = vpack.c.b16 %v970, %v969
        %v988 = vpack.c.b16 %v972, %v971
        %v989 = vpack.c.b16 %v974, %v973
        %v990 = vpack.c.b16 %v976, %v975
        %v991 = vpack.c.b16 %v978, %v977
        %v992 = vpack.c.b16 %v980, %v979
        %v993 = vpack.c.b16 %v982, %v981
        %v994 = vpack.c.b16 %v984, %v983
        %v995 = vpack.c.b16 %v986, %v985
        %v997 = vsel %vm578, %v987, 0
        %v1000 = vsel %vm578, %v988, 0
        %v1003 = vsel %vm578, %v989, 0
        %v1006 = vsel %vm578, %v990, 0
        %v1009 = vsel %vm578, %v991, 0
        %v1012 = vsel %vm578, %v992, 0
        %v1015 = vsel %vm578, %v993, 0
        %v1018 = vsel %vm578, %v994, 0
        %v1021 = vsel %vm578, %v995, 0
        %1023 = vmatprep.subr.bf16.mxu0 0
        %1024 = vmatpush1.bf16.msra.mxu0 %v575
        %1025 = vmatprep.subr.bf16.mxu0 0
        %1026 = vmatpush1.bf16.msra.mxu0 %v611
        %1027 = vmatprep.subr.bf16.mxu0 0
        %1028 = vmatpush1.bf16.msra.mxu0 0
        %1029 = vmatprep.subr.bf16.mxu0 0
        %1030 = vmatpush1.bf16.msra.mxu0 0
        %1031 = vmatprep.subr.bf16.mxu0 0
        %1032 = vmatpush1.bf16.msra.mxu0 0
        %1033 = vmatprep.subr.bf16.mxu0 0
        %1034 = vmatpush1.bf16.msra.mxu0 0
        %1035 = vmatprep.subr.bf16.mxu0 0
        %1036 = vmatpush1.bf16.msra.mxu0 0
        %1037 = vmatprep.subr.bf16.mxu0 0
        %1038 = vmatpush1.bf16.msra.mxu0 0
        %1039 = vmatprep.subr.bf16.mxu0 0
        %1040 = vmatpush1.bf16.msra.mxu0 0
        %1041 = vmatprep.subr.bf16.mxu0 0
        %1042 = vmatpush1.bf16.msra.mxu0 0
        %1043 = vmatprep.subr.bf16.mxu0 0
        %1044 = vmatpush1.bf16.msra.mxu0 0
        %1045 = vmatprep.subr.bf16.mxu0 0
        %1046 = vmatpush1.bf16.msra.mxu0 0
        %1047 = vmatprep.subr.bf16.mxu0 0
        %1048 = vmatpush1.bf16.msra.mxu0 0
        %1049 = vmatprep.subr.bf16.mxu0 0
        %1050 = vmatpush1.bf16.msra.mxu0 0
        %1051 = vmatprep.subr.bf16.mxu0 0
        %1052 = vmatpush1.bf16.msra.mxu0 0
        %1053 = vmatprep.subr.bf16.mxu0 0
        %1054 = vmatpush1.bf16.msra.mxu0 0
        %1055 = vmatprep.mubr.bf16.mxu0 0
        %1056 = vmatmul.mubr.bf16.gmra.mrb[0].mxu0 %v997
        %v1057 = vpop.f32.mrb[0].mxu0
        %v1058 = vadd.f32 0.0, %v1057
        %v1059 = vpop.f32.mrb[0].mxu0
        %v1060 = vpop.f32.mrb[0].mxu0
        %v1061 = vadd.f32 0.0, %v1060
        %v1062 = vpop.f32.mrb[0].mxu0
        %1063 = vmatprep.mubr.bf16.mxu0 0
        %1064 = vmatmul.mubr.bf16.gmra.mrb[0].mxu0 %v1000
        %v1065 = vpop.f32.mrb[0].mxu0
        %v1066 = vadd.f32 0.0, %v1065
        %v1067 = vpop.f32.mrb[0].mxu0
        %v1068 = vpop.f32.mrb[0].mxu0
        %v1069 = vadd.f32 0.0, %v1068
        %v1070 = vpop.f32.mrb[0].mxu0
        %1071 = vmatprep.mubr.bf16.mxu0 0
        %1072 = vmatmul.mubr.bf16.gmra.mrb[0].mxu0 %v1003
        %v1073 = vpop.f32.mrb[0].mxu0
        %v1074 = vadd.f32 0.0, %v1073
        %v1075 = vpop.f32.mrb[0].mxu0
        %v1076 = vpop.f32.mrb[0].mxu0
        %v1077 = vadd.f32 0.0, %v1076
        %v1078 = vpop.f32.mrb[0].mxu0
        %1079 = vmatprep.mubr.bf16.mxu0 0
        %1080 = vmatmul.mubr.bf16.gmra.mrb[0].mxu0 %v1006
        %v1081 = vpop.f32.mrb[0].mxu0
        %v1082 = vadd.f32 0.0, %v1081
        %v1083 = vpop.f32.mrb[0].mxu0
        %v1084 = vpop.f32.mrb[0].mxu0
        %v1085 = vadd.f32 0.0, %v1084
        %v1086 = vpop.f32.mrb[0].mxu0
        %1087 = vmatprep.mubr.bf16.mxu0 0
        %1088 = vmatmul.mubr.bf16.gmra.mrb[0].mxu0 %v1009
        %v1089 = vpop.f32.mrb[0].mxu0
        %v1090 = vadd.f32 0.0, %v1089
        %v1091 = vpop.f32.mrb[0].mxu0
        %v1092 = vpop.f32.mrb[0].mxu0
        %v1093 = vadd.f32 0.0, %v1092
        %v1094 = vpop.f32.mrb[0].mxu0
        %1095 = vmatprep.mubr.bf16.mxu0 0
        %1096 = vmatmul.mubr.bf16.gmra.mrb[0].mxu0 %v1012
        %v1097 = vpop.f32.mrb[0].mxu0
        %v1098 = vadd.f32 0.0, %v1097
        %v1099 = vpop.f32.mrb[0].mxu0
        %v1100 = vpop.f32.mrb[0].mxu0
        %v1101 = vadd.f32 0.0, %v1100
        %v1102 = vpop.f32.mrb[0].mxu0
        %1103 = vmatprep.mubr.bf16.mxu0 0
        %1104 = vmatmul.mubr.bf16.gmra.mrb[0].mxu0 %v1015
        %v1105 = vpop.f32.mrb[0].mxu0
        %v1106 = vadd.f32 0.0, %v1105
        %v1107 = vpop.f32.mrb[0].mxu0
        %v1108 = vpop.f32.mrb[0].mxu0
        %v1109 = vadd.f32 0.0, %v1108
        %v1110 = vpop.f32.mrb[0].mxu0
        %1111 = vmatprep.mubr.bf16.mxu0 0
        %1112 = vmatmul.mubr.bf16.gmra.mrb[0].mxu0 %v1018
        %v1113 = vpop.f32.mrb[0].mxu0
        %v1114 = vadd.f32 0.0, %v1113
        %v1115 = vpop.f32.mrb[0].mxu0
        %v1116 = vpop.f32.mrb[0].mxu0
        %v1117 = vadd.f32 0.0, %v1116
        %v1118 = vpop.f32.mrb[0].mxu0
        %1119 = vmatprep.mubr.bf16.mxu0 0
        %1120 = vmatmul.mubr.bf16.gmra.mrb[0].mxu0 %v1021
        %v1121 = vpop.f32.mrb[0].mxu0
        %v1122 = vadd.f32 0.0, %v1121
        %v1123 = vpop.f32.mrb[0].mxu0
        %v1124 = vpop.f32.mrb[0].mxu0
        %v1125 = vadd.f32 0.0, %v1124
        %v1126 = vpop.f32.mrb[0].mxu0
        %1127 = vdwg.mxu0
        %v1128 = vmax.f32 %v914, %v1058
        %v1129 = vmax.f32 %v915, %v1061
        %v1130 = vmax.f32 %v916, %v1066
        %v1131 = vmax.f32 %v917, %v1069
        %v1132 = vmax.f32 %v918, %v1074
        %v1133 = vmax.f32 %v919, %v1077
        %v1134 = vmax.f32 %v920, %v1082
        %v1135 = vmax.f32 %v921, %v1085
        %v1136 = vmax.f32 %v922, %v1090
        %v1137 = vmax.f32 %v923, %v1093
        %v1138 = vmax.f32 %v924, %v1098
        %v1139 = vmax.f32 %v925, %v1101
        %v1140 = vmax.f32 %v926, %v1106
        %v1141 = vmax.f32 %v927, %v1109
        %v1142 = vmax.f32 %v928, %v1114
        %v1143 = vmax.f32 %v929, %v1117
        %v1144 = vmax.f32 %v930, %v1122
        %v1145 = vmax.f32 %v931, %v1125
        %s1146 = scalar_lea.vmem %s471, 216 [#allocation2]
        %v1147 = vld [vmem:[%s1146] sm:$0xf]
        %v1148 = vld [vmem:[%s1146 + $0x4] sm:$0xf]
        %v1149 = vld [vmem:[%s1146 + $0x8] sm:$0xf]
        %v1150 = vld [vmem:[%s1146 + $0xc] sm:$0xf]
        %v1151 = vld [vmem:[%s1146 + $0x10] sm:$0xf]
        %v1152 = vld [vmem:[%s1146 + $0x14] sm:$0xf]
        %v1153 = vld [vmem:[%s1146 + $0x18] sm:$0xf]
        %v1154 = vld [vmem:[%s1146 + $0x1c] sm:$0xf]
        %v1155 = vld [vmem:[%s1146 + $0x20] sm:$0xf]
        %v1156 = vld [vmem:[%s1146 + $0x24] sm:$0xf]
        %v1157 = vld [vmem:[%s1146 + $0x28] sm:$0xf]
        %v1158 = vld [vmem:[%s1146 + $0x2c] sm:$0xf]
        %v1159 = vld [vmem:[%s1146 + $0x30] sm:$0xf]
        %v1160 = vld [vmem:[%s1146 + $0x34] sm:$0xf]
        %v1161 = vld [vmem:[%s1146 + $0x38] sm:$0xf]
        %v1162 = vld [vmem:[%s1146 + $0x3c] sm:$0xf]
        %v1163 = vld [vmem:[%s1146 + $0x40] sm:$0xf]
        %v1164 = vld [vmem:[%s1146 + $0x44] sm:$0xf]
        %v1183 = vunpack.c.l.b16 %v1147
        %v1184 = vunpack.c.l.b16 %v1148
        %v1185 = vunpack.c.l.b16 %v1149
        %v1186 = vunpack.c.l.b16 %v1150
        %v1187 = vunpack.c.l.b16 %v1151
        %v1188 = vunpack.c.l.b16 %v1152
        %v1189 = vunpack.c.l.b16 %v1153
        %v1190 = vunpack.c.l.b16 %v1154
        %v1191 = vunpack.c.l.b16 %v1155
        %v1192 = vunpack.c.l.b16 %v1156
        %v1193 = vunpack.c.l.b16 %v1157
        %v1194 = vunpack.c.l.b16 %v1158
        %v1195 = vunpack.c.l.b16 %v1159
        %v1196 = vunpack.c.l.b16 %v1160
        %v1197 = vunpack.c.l.b16 %v1161
        %v1198 = vunpack.c.l.b16 %v1162
        %v1199 = vunpack.c.l.b16 %v1163
        %v1200 = vunpack.c.l.b16 %v1164
        %v1201 = vpack.c.b16 %v1184, %v1183
        %v1202 = vpack.c.b16 %v1186, %v1185
        %v1203 = vpack.c.b16 %v1188, %v1187
        %v1204 = vpack.c.b16 %v1190, %v1189
        %v1205 = vpack.c.b16 %v1192, %v1191
        %v1206 = vpack.c.b16 %v1194, %v1193
        %v1207 = vpack.c.b16 %v1196, %v1195
        %v1208 = vpack.c.b16 %v1198, %v1197
        %v1209 = vpack.c.b16 %v1200, %v1199
        %v1211 = vsel %vm578, %v1201, 0
        %v1214 = vsel %vm578, %v1202, 0
        %v1217 = vsel %vm578, %v1203, 0
        %v1220 = vsel %vm578, %v1204, 0
        %v1223 = vsel %vm578, %v1205, 0
        %v1226 = vsel %vm578, %v1206, 0
        %v1229 = vsel %vm578, %v1207, 0
        %v1232 = vsel %vm578, %v1208, 0
        %v1235 = vsel %vm578, %v1209, 0
        %1237 = vmatprep.subr.bf16.mxu0 0
        %1238 = vmatpush1.bf16.msra.mxu0 %v575
        %1239 = vmatprep.subr.bf16.mxu0 0
        %1240 = vmatpush1.bf16.msra.mxu0 %v611
        %1241 = vmatprep.subr.bf16.mxu0 0
        %1242 = vmatpush1.bf16.msra.mxu0 0
        %1243 = vmatprep.subr.bf16.mxu0 0
        %1244 = vmatpush1.bf16.msra.mxu0 0
        %1245 = vmatprep.subr.bf16.mxu0 0
        %1246 = vmatpush1.bf16.msra.mxu0 0
        %1247 = vmatprep.subr.bf16.mxu0 0
        %1248 = vmatpush1.bf16.msra.mxu0 0
        %1249 = vmatprep.subr.bf16.mxu0 0
        %1250 = vmatpush1.bf16.msra.mxu0 0
        %1251 = vmatprep.subr.bf16.mxu0 0
        %1252 = vmatpush1.bf16.msra.mxu0 0
        %1253 = vmatprep.subr.bf16.mxu0 0
        %1254 = vmatpush1.bf16.msra.mxu0 0
        %1255 = vmatprep.subr.bf16.mxu0 0
        %1256 = vmatpush1.bf16.msra.mxu0 0
        %1257 = vmatprep.subr.bf16.mxu0 0
        %1258 = vmatpush1.bf16.msra.mxu0 0
        %1259 = vmatprep.subr.bf16.mxu0 0
        %1260 = vmatpush1.bf16.msra.mxu0 0
        %1261 = vmatprep.subr.bf16.mxu0 0
        %1262 = vmatpush1.bf16.msra.mxu0 0
        %1263 = vmatprep.subr.bf16.mxu0 0
        %1264 = vmatpush1.bf16.msra.mxu0 0
        %1265 = vmatprep.subr.bf16.mxu0 0
        %1266 = vmatpush1.bf16.msra.mxu0 0
        %1267 = vmatprep.subr.bf16.mxu0 0
        %1268 = vmatpush1.bf16.msra.mxu0 0
        %1269 = vmatprep.mubr.bf16.mxu0 0
        %1270 = vmatmul.mubr.bf16.gmra.mrb[0].mxu0 %v1211
        %v1271 = vpop.f32.mrb[0].mxu0
        %v1272 = vadd.f32 0.0, %v1271
        %v1273 = vpop.f32.mrb[0].mxu0
        %v1274 = vpop.f32.mrb[0].mxu0
        %v1275 = vadd.f32 0.0, %v1274
        %v1276 = vpop.f32.mrb[0].mxu0
        %1277 = vmatprep.mubr.bf16.mxu0 0
        %1278 = vmatmul.mubr.bf16.gmra.mrb[0].mxu0 %v1214
        %v1279 = vpop.f32.mrb[0].mxu0
        %v1280 = vadd.f32 0.0, %v1279
        %v1281 = vpop.f32.mrb[0].mxu0
        %v1282 = vpop.f32.mrb[0].mxu0
        %v1283 = vadd.f32 0.0, %v1282
        %v1284 = vpop.f32.mrb[0].mxu0
        %1285 = vmatprep.mubr.bf16.mxu0 0
        %1286 = vmatmul.mubr.bf16.gmra.mrb[0].mxu0 %v1217
        %v1287 = vpop.f32.mrb[0].mxu0
        %v1288 = vadd.f32 0.0, %v1287
        %v1289 = vpop.f32.mrb[0].mxu0
        %v1290 = vpop.f32.mrb[0].mxu0
        %v1291 = vadd.f32 0.0, %v1290
        %v1292 = vpop.f32.mrb[0].mxu0
        %1293 = vmatprep.mubr.bf16.mxu0 0
        %1294 = vmatmul.mubr.bf16.gmra.mrb[0].mxu0 %v1220
        %v1295 = vpop.f32.mrb[0].mxu0
        %v1296 = vadd.f32 0.0, %v1295
        %v1297 = vpop.f32.mrb[0].mxu0
        %v1298 = vpop.f32.mrb[0].mxu0
        %v1299 = vadd.f32 0.0, %v1298
        %v1300 = vpop.f32.mrb[0].mxu0
        %1301 = vmatprep.mubr.bf16.mxu0 0
        %1302 = vmatmul.mubr.bf16.gmra.mrb[0].mxu0 %v1223
        %v1303 = vpop.f32.mrb[0].mxu0
        %v1304 = vadd.f32 0.0, %v1303
        %v1305 = vpop.f32.mrb[0].mxu0
        %v1306 = vpop.f32.mrb[0].mxu0
        %v1307 = vadd.f32 0.0, %v1306
        %v1308 = vpop.f32.mrb[0].mxu0
        %1309 = vmatprep.mubr.bf16.mxu0 0
        %1310 = vmatmul.mubr.bf16.gmra.mrb[0].mxu0 %v1226
        %v1311 = vpop.f32.mrb[0].mxu0
        %v1312 = vadd.f32 0.0, %v1311
        %v1313 = vpop.f32.mrb[0].mxu0
        %v1314 = vpop.f32.mrb[0].mxu0
        %v1315 = vadd.f32 0.0, %v1314
        %v1316 = vpop.f32.mrb[0].mxu0
        %1317 = vmatprep.mubr.bf16.mxu0 0
        %1318 = vmatmul.mubr.bf16.gmra.mrb[0].mxu0 %v1229
        %v1319 = vpop.f32.mrb[0].mxu0
        %v1320 = vadd.f32 0.0, %v1319
        %v1321 = vpop.f32.mrb[0].mxu0
        %v1322 = vpop.f32.mrb[0].mxu0
        %v1323 = vadd.f32 0.0, %v1322
        %v1324 = vpop.f32.mrb[0].mxu0
        %1325 = vmatprep.mubr.bf16.mxu0 0
        %1326 = vmatmul.mubr.bf16.gmra.mrb[0].mxu0 %v1232
        %v1327 = vpop.f32.mrb[0].mxu0
        %v1328 = vadd.f32 0.0, %v1327
        %v1329 = vpop.f32.mrb[0].mxu0
        %v1330 = vpop.f32.mrb[0].mxu0
        %v1331 = vadd.f32 0.0, %v1330
        %v1332 = vpop.f32.mrb[0].mxu0
        %1333 = vmatprep.mubr.bf16.mxu0 0
        %1334 = vmatmul.mubr.bf16.gmra.mrb[0].mxu0 %v1235
        %v1335 = vpop.f32.mrb[0].mxu0
        %v1336 = vadd.f32 0.0, %v1335
        %v1337 = vpop.f32.mrb[0].mxu0
        %v1338 = vpop.f32.mrb[0].mxu0
        %v1339 = vadd.f32 0.0, %v1338
        %v1340 = vpop.f32.mrb[0].mxu0
        %1341 = vdwg.mxu0
        %v1342 = vmax.f32 %v1128, %v1272
        %v1343 = vmax.f32 %v1129, %v1275
        %v1344 = vmax.f32 %v1130, %v1280
        %v1345 = vmax.f32 %v1131, %v1283
        %v1346 = vmax.f32 %v1132, %v1288
        %v1347 = vmax.f32 %v1133, %v1291
        %v1348 = vmax.f32 %v1134, %v1296
        %v1349 = vmax.f32 %v1135, %v1299
        %v1350 = vmax.f32 %v1136, %v1304
        %v1351 = vmax.f32 %v1137, %v1307
        %v1352 = vmax.f32 %v1138, %v1312
        %v1353 = vmax.f32 %v1139, %v1315
        %v1354 = vmax.f32 %v1140, %v1320
        %v1355 = vmax.f32 %v1141, %v1323
        %v1356 = vmax.f32 %v1142, %v1328
        %v1357 = vmax.f32 %v1143, %v1331
        %v1358 = vmax.f32 %v1144, %v1336
        %v1359 = vmax.f32 %v1145, %v1339
        %v1360 = vld [vmem:[%s2] sm:$0x1]
        %v1362 = vlaneseq
        %v1363 = vshrl.u32 %v1362, 7
        %v1364 = vsub.s32 0, %v1363
        %v1365 = vrot.slane %v1360, %v1364
        %v1367 = vadd.f32 %v1342, %v1365
        %v1368 = vadd.f32 %v1343, %v1365
        %v1369 = vadd.f32 %v1344, %v1365
        %v1370 = vadd.f32 %v1345, %v1365
        %v1371 = vadd.f32 %v1346, %v1365
        %v1372 = vadd.f32 %v1347, %v1365
        %v1373 = vadd.f32 %v1348, %v1365
        %v1374 = vadd.f32 %v1349, %v1365
        %v1375 = vadd.f32 %v1350, %v1365
        %v1376 = vadd.f32 %v1351, %v1365
        %v1377 = vadd.f32 %v1352, %v1365
        %v1378 = vadd.f32 %v1353, %v1365
        %v1379 = vadd.f32 %v1354, %v1365
        %v1380 = vadd.f32 %v1355, %v1365
        %v1381 = vadd.f32 %v1356, %v1365
        %v1382 = vadd.f32 %v1357, %v1365
        %v1383 = vadd.f32 %v1358, %v1365
        %v1384 = vadd.f32 %v1359, %v1365
        %v1385 = vmax.f32 %v1367, 0.0
        %v1386 = vmax.f32 %v1368, 0.0
        %v1387 = vmax.f32 %v1369, 0.0
        %v1388 = vmax.f32 %v1370, 0.0
        %v1389 = vmax.f32 %v1371, 0.0
        %v1390 = vmax.f32 %v1372, 0.0
        %v1391 = vmax.f32 %v1373, 0.0
        %v1392 = vmax.f32 %v1374, 0.0
        %v1393 = vmax.f32 %v1375, 0.0
        %v1394 = vmax.f32 %v1376, 0.0
        %v1395 = vmax.f32 %v1377, 0.0
        %v1396 = vmax.f32 %v1378, 0.0
        %v1397 = vmax.f32 %v1379, 0.0
        %v1398 = vmax.f32 %v1380, 0.0
        %v1399 = vmax.f32 %v1381, 0.0
        %v1400 = vmax.f32 %v1382, 0.0
        %v1401 = vmax.f32 %v1383, 0.0
        %v1402 = vmax.f32 %v1384, 0.0
        %v1403 = vpack.c.bf16 %v1386, %v1385
        %v1404 = vpack.c.bf16 %v1388, %v1387
        %v1405 = vpack.c.bf16 %v1390, %v1389
        %v1406 = vpack.c.bf16 %v1392, %v1391
        %v1407 = vpack.c.bf16 %v1394, %v1393
        %v1408 = vpack.c.bf16 %v1396, %v1395
        %v1409 = vpack.c.bf16 %v1398, %v1397
        %v1410 = vpack.c.bf16 %v1400, %v1399
        %v1411 = vpack.c.bf16 %v1402, %v1401
        %v1421 = vunpack.c.l.b16 %v1403
        %v1422 = vunpack.c.h.b16 %v1403
        %v1423 = vunpack.c.l.b16 %v1404
        %v1424 = vunpack.c.h.b16 %v1404
        %v1425 = vunpack.c.l.b16 %v1405
        %v1426 = vunpack.c.h.b16 %v1405
        %v1427 = vunpack.c.l.b16 %v1406
        %v1428 = vunpack.c.h.b16 %v1406
        %v1429 = vunpack.c.l.b16 %v1407
        %v1430 = vunpack.c.h.b16 %v1407
        %v1431 = vunpack.c.l.b16 %v1408
        %v1432 = vunpack.c.h.b16 %v1408
        %v1433 = vunpack.c.l.b16 %v1409
        %v1434 = vunpack.c.h.b16 %v1409
        %v1435 = vunpack.c.l.b16 %v1410
        %v1436 = vunpack.c.h.b16 %v1410
        %v1437 = vunpack.c.l.b16 %v1411
        %v1438 = vunpack.c.h.b16 %v1411
        %v1439 = vpack.c.b16 %v1421, %v1421
        %v1440 = vpack.c.b16 %v1422, %v1422
        %v1441 = vpack.c.b16 %v1423, %v1423
        %v1442 = vpack.c.b16 %v1424, %v1424
        %v1443 = vpack.c.b16 %v1425, %v1425
        %v1444 = vpack.c.b16 %v1426, %v1426
        %v1445 = vpack.c.b16 %v1427, %v1427
        %v1446 = vpack.c.b16 %v1428, %v1428
        %v1447 = vpack.c.b16 %v1429, %v1429
        %v1448 = vpack.c.b16 %v1430, %v1430
        %v1449 = vpack.c.b16 %v1431, %v1431
        %v1450 = vpack.c.b16 %v1432, %v1432
        %v1451 = vpack.c.b16 %v1433, %v1433
        %v1452 = vpack.c.b16 %v1434, %v1434
        %v1453 = vpack.c.b16 %v1435, %v1435
        %v1454 = vpack.c.b16 %v1436, %v1436
        %v1455 = vpack.c.b16 %v1437, %v1437
        %v1456 = vpack.c.b16 %v1438, %v1438
        %vm1475 = vcmask 44032
        %1476 = vst.msk [vmem:[%s497] sm:$0xf] %vm1475, %v1439
        %1477 = vst.msk [vmem:[%s497 + $0x4] sm:$0xf] %vm1475, %v1440
        %1478 = vst.msk [vmem:[%s497 + $0x8] sm:$0xf] %vm1475, %v1441
        %1479 = vst.msk [vmem:[%s497 + $0xc] sm:$0xf] %vm1475, %v1442
        %1480 = vst.msk [vmem:[%s497 + $0x10] sm:$0xf] %vm1475, %v1443
        %1481 = vst.msk [vmem:[%s497 + $0x14] sm:$0xf] %vm1475, %v1444
        %1482 = vst.msk [vmem:[%s497 + $0x18] sm:$0xf] %vm1475, %v1445
        %1483 = vst.msk [vmem:[%s497 + $0x1c] sm:$0xf] %vm1475, %v1446
        %1484 = vst.msk [vmem:[%s497 + $0x20] sm:$0xf] %vm1475, %v1447
        %1485 = vst.msk [vmem:[%s497 + $0x24] sm:$0xf] %vm1475, %v1448
        %1486 = vst.msk [vmem:[%s497 + $0x28] sm:$0xf] %vm1475, %v1449
        %1487 = vst.msk [vmem:[%s497 + $0x2c] sm:$0xf] %vm1475, %v1450
        %1488 = vst.msk [vmem:[%s497 + $0x30] sm:$0xf] %vm1475, %v1451
        %1489 = vst.msk [vmem:[%s497 + $0x34] sm:$0xf] %vm1475, %v1452
        %1490 = vst.msk [vmem:[%s497 + $0x38] sm:$0xf] %vm1475, %v1453
        %1491 = vst.msk [vmem:[%s497 + $0x3c] sm:$0xf] %vm1475, %v1454
        %1492 = vst.msk [vmem:[%s497 + $0x40] sm:$0xf] %vm1475, %v1455
        %1493 = vst.msk [vmem:[%s497 + $0x44] sm:$0xf] %vm1475, %v1456
        %s1494 = smul.u32 18, %s14
        %p1495 = scmp.lt.s32.totalorder %s1494, 35
        %s1496 = scalar_select %p1495, %s1494, 35
        %s1497 = smul.addr %s1496, 4
        %s1498 = scalar_lea.vmem %s3, %s1497
        // Predicated region
        $region74: #{lenet_forward.3} parent=68 // pred_check
          %p1499 = pneg %p100
        $region75: #{lenet_forward.3} parent=68 // pred_check_branch
          %1501 = sbr.rel (%p1499) target = $region77
        $region76: #{lenet_forward.3} parent=68 // pred_region
          %s1502 = smul.u32 18, %s14
        $region77: #{lenet_forward.3} parent=68 // pred_fallthru
          _
      $region69: #{lenet_forward.3} parent=5 // pred_fallthru
        _
      %p1503 = scmp.le.s32.totalorder 2, %s9
      // Predicated region
      $region78: #{lenet_forward.3} parent=5 // pred_check
        %p1504 = pneg %p1503
      $region79: #{lenet_forward.3} parent=5 // pred_check_branch
        %1506 = sbr.rel (%p1504) target = $region81
      $region80: #{lenet_forward.3} parent=5 // pred_region
        %s1507 = ssub.s32 %s9, 2
        // Predicated region
        $region82: #{lenet_forward.3} parent=80 // pred_check
          %p1508 = pneg %p106
        $region83: #{lenet_forward.3} parent=80 // pred_check_branch
          %1510 = sbr.rel (%p1508) target = $region85
        $region84: #{lenet_forward.3} parent=80 // pred_region
          %s1511 = smul.u32 18, %s15
          %p1512 = scmp.lt.s32.totalorder %s1511, 35
          %s1513 = scalar_select %p1512, %s1511, 35
          %s1514 = smul.addr %s1513, 4
          %s1515 = scalar_lea.vmem %s3, %s1514
        $region85: #{lenet_forward.3} parent=80 // pred_fallthru
          _
      $region81: #{lenet_forward.3} parent=5 // pred_fallthru
        _
    $region6: #{lenet_forward.3} parent=1 // loop_footer
      %s13 = sadd.s32 1, %s9
    $region7: #{lenet_forward.3} parent=1 // loop_footer_branch
      %8 = sbr.rel target = $region3
    $region8: #{lenet_forward.3} parent=1 // loop_exit
      _

// kernel: lenet_forward.4
$region0: #{lenet_forward.4}
  #allocation0 [shape = 'u32[]', space=smem, size = 0x4, offset = 0x4, fixed_abs, tag = 'smem constant byte address 0x4 - core index']
  #allocation1 [shape = 'u32[144,128]{1,0:T(1,128)}', space=vmem, size = 0x12000, scoped, tag = 'internal scratch']
  %s0 = inlined_call_operand.vmem [shape: bf16[4,32,150], index: 0, kind: input, shape index: {}]
  %s1 = inlined_call_operand.vmem [shape: bf16[150,16], index: 1, kind: input, shape index: {}]
  %s2 = inlined_call_operand.vmem [shape: f32[1,16], index: 2, kind: input, shape index: {}]
  %s3 = inlined_call_operand.vmem [shape: bf16[32,16], index: 3, kind: output, shape index: {}]
  %s4 = sld [smem:[#allocation0]]
  $region83: #{lenet_forward.4} parent=0
    _
  %s6 = ssub.s32 1, %s4
  %s7 = scalar_select 0, %s6, %s4
  $region1: #{lenet_forward.4} parent=0
    #allocation2 [shape = 'u8[65536]{0}', space=vmem, size = 0x10000, scoped, tag = 'input window, operand 0']
    loop: start=0, step=1, limit=4
    $region2: #{lenet_forward.4} parent=1 // loop_pre_header
      _
    $region3: #{lenet_forward.4} parent=1 // loop_header
      %s9 = sphi 0, %s13
      %p10 = scmp.ge.s32.totalorder %s9, 4
      %s19 = sphi 0, %s21
      %s22 = sphi 0, %s19
      %s23 = sphi 0, %s22
      %s39 = sphi 0, %s23
      %s43 = sphi 0, %s43
      %s45 = sphi 0, %s43
      %s46 = sphi 0, %s45
      %s60 = sphi 0, %s46
      %s64 = sphi 0, %s64
      %s66 = sphi 0, %s64
      %s67 = sphi 0, %s66
      %s81 = sphi 0, %s67
      %s87 = sphi 0, %s89
      %s90 = sphi 0, %s87
      %s91 = sphi 0, %s90
      %s107 = sphi 0, %s91
    $region4: #{lenet_forward.4} parent=1 // loop_header_branch
      %12 = sbr.rel (%p10) target = $region8
    $region5: #{lenet_forward.4} parent=1 // loop_body
      %s14 = ssub.s32 %s9, 1
      %s15 = ssub.s32 %s9, 2
      %s16 = sadd.s32 %s9, 1
      %s17 = ssub.s32 %s9, %s16
      %p18 = scmp.eq.s32.totalorder %s17, 0
      %s20 = sadd.s32 %s19, 1
      %s21 = scalar_select %p18, %s19, %s20
      %p24 = pneg %p18
      %p25 = scmp.eq.s32.totalorder %s9, 1
      %p26 = por %p24, %p25
      %p27 = scmp.ne.s32.totalorder %s19, %s22
      %p28 = scmp.eq.s32.totalorder %s9, 0
      %p29 = por %p27, %p28
      %p30 = scmp.ne.s32.totalorder %s19, %s22
      %p31 = scmp.eq.s32.totalorder %s14, 1
      %p32 = por %p30, %p31
      %p33 = scmp.ne.s32.totalorder %s22, %s23
      %p34 = scmp.eq.s32.totalorder %s14, 0
      %p35 = por %p33, %p34
      %p36 = scmp.ne.s32.totalorder %s22, %s23
      %p37 = scmp.eq.s32.totalorder %s15, 1
      %p38 = por %p36, %p37
      %p40 = scmp.ne.s32.totalorder %s23, %s39
      %p41 = scmp.eq.s32.totalorder %s15, 0
      %p42 = por %p40, %p41
      %s44 = sadd.s32 %s43, 1
      %p47 = scmp.eq.s32.totalorder %s9, 1
      %p48 = scmp.ne.s32.totalorder %s43, %s45
      %p49 = scmp.eq.s32.totalorder %s9, 0
      %p50 = por %p48, %p49
      %p51 = scmp.ne.s32.totalorder %s43, %s45
      %p52 = scmp.eq.s32.totalorder %s14, 1
      %p53 = por %p51, %p52
      %p54 = scmp.ne.s32.totalorder %s45, %s46
      %p55 = scmp.eq.s32.totalorder %s14, 0
      %p56 = por %p54, %p55
      %p57 = scmp.ne.s32.totalorder %s45, %s46
      %p58 = scmp.eq.s32.totalorder %s15, 1
      %p59 = por %p57, %p58
      %p61 = scmp.ne.s32.totalorder %s46, %s60
      %p62 = scmp.eq.s32.totalorder %s15, 0
      %p63 = por %p61, %p62
      %s65 = sadd.s32 %s64, 1
      %p68 = scmp.eq.s32.totalorder %s9, 1
      %p69 = scmp.ne.s32.totalorder %s64, %s66
      %p70 = scmp.eq.s32.totalorder %s9, 0
      %p71 = por %p69, %p70
      %p72 = scmp.ne.s32.totalorder %s64, %s66
      %p73 = scmp.eq.s32.totalorder %s14, 1
      %p74 = por %p72, %p73
      %p75 = scmp.ne.s32.totalorder %s66, %s67
      %p76 = scmp.eq.s32.totalorder %s14, 0
      %p77 = por %p75, %p76
      %p78 = scmp.ne.s32.totalorder %s66, %s67
      %p79 = scmp.eq.s32.totalorder %s15, 1
      %p80 = por %p78, %p79
      %p82 = scmp.ne.s32.totalorder %s67, %s81
      %p83 = scmp.eq.s32.totalorder %s15, 0
      %p84 = por %p82, %p83
      %s85 = ssub.s32 %s9, %s16
      %p86 = scmp.eq.s32.totalorder %s85, 0
      %s88 = sadd.s32 %s87, 1
      %s89 = scalar_select %p86, %s87, %s88
      %p92 = pneg %p86
      %p93 = scmp.eq.s32.totalorder %s9, 1
      %p94 = por %p92, %p93
      %p95 = scmp.ne.s32.totalorder %s87, %s90
      %p96 = scmp.eq.s32.totalorder %s9, 0
      %p97 = por %p95, %p96
      %p98 = scmp.ne.s32.totalorder %s87, %s90
      %p99 = scmp.eq.s32.totalorder %s14, 1
      %p100 = por %p98, %p99
      %p101 = scmp.ne.s32.totalorder %s90, %s91
      %p102 = scmp.eq.s32.totalorder %s14, 0
      %p103 = por %p101, %p102
      %p104 = scmp.ne.s32.totalorder %s90, %s91
      %p105 = scmp.eq.s32.totalorder %s15, 1
      %p106 = por %p104, %p105
      %p108 = scmp.ne.s32.totalorder %s91, %s107
      %p109 = scmp.eq.s32.totalorder %s15, 0
      %p110 = por %p108, %p109
      %p111 = scmp.le.s32.totalorder 1, %s9
      %p112 = scmp.lt.s32.totalorder %s9, 3
      %p113 = pnand %p111, %p112
      %p114 = pneg %p113
      // Predicated region
      $region9: #{lenet_forward.4} parent=5 // pred_check
        _
      $region10: #{lenet_forward.4} parent=5 // pred_check_branch
        %116 = sbr.rel (%p113) target = $region12
      $region11: #{lenet_forward.4} parent=5 // pred_region
        %s117 = ssub.s32 %s9, 1
        // Predicated region
        $region13: #{lenet_forward.4} parent=11 // pred_check
          %p118 = pneg %p56
        $region14: #{lenet_forward.4} parent=11 // pred_check_branch
          %120 = sbr.rel (%p118) target = $region16
        $region15: #{lenet_forward.4} parent=11 // pred_region
          _
        $region16: #{lenet_forward.4} parent=11 // pred_fallthru
          _
        // Predicated region
        $region17: #{lenet_forward.4} parent=11 // pred_check
          %p121 = pneg %p77
        $region18: #{lenet_forward.4} parent=11 // pred_check_branch
          %123 = sbr.rel (%p121) target = $region20
        $region19: #{lenet_forward.4} parent=11 // pred_region
          _
        $region20: #{lenet_forward.4} parent=11 // pred_fallthru
          _
      $region12: #{lenet_forward.4} parent=5 // pred_fallthru
        _
      %p124 = scmp.lt.s32.totalorder %s9, 2
      // Predicated region
      $region21: #{lenet_forward.4} parent=5 // pred_check
        %p125 = pneg %p124
      $region22: #{lenet_forward.4} parent=5 // pred_check_branch
        %127 = sbr.rel (%p125) target = $region24
      $region23: #{lenet_forward.4} parent=5 // pred_region
        // Predicated region
        $region25: #{lenet_forward.4} parent=23 // pred_check
          %p128 = pneg %p29
        $region26: #{lenet_forward.4} parent=23 // pred_check_branch
          %130 = sbr.rel (%p128) target = $region28
        $region27: #{lenet_forward.4} parent=23 // pred_region
          %s131 = sand.u32 %s19, 1
          %s132 = sand.u32 %s19, 1
          %s133 = smul.addr %s132, 64
          %s134 = scalar_lea.vmem [#allocation2], %s133
          %s135 = smul.u32 2, %s9
          %s136 = smul.addr %s135, 2
          %s137 = smul.addr %s136, 4
          %s138 = scalar_lea.vmem %s0, %s137
          // Predicated region
          $region29: #{lenet_forward.4} parent=27 // pred_check
            _
          $region30: #{lenet_forward.4} parent=27 // pred_check_branch
            %140 = sbr.rel (0) target = $region32
          $region31: #{lenet_forward.4} parent=27 // pred_region
            // Predicated region
            $region33: #{lenet_forward.4} parent=31 // pred_check
              _
            $region34: #{lenet_forward.4} parent=31 // pred_check_branch
              %142 = sbr.rel (0) target = $region36
            $region35: #{lenet_forward.4} parent=31 // pred_region
              // Predicated region
              $region48: #{lenet_forward.4} parent=35 // pred_check
                _
              $region49: #{lenet_forward.4} parent=35 // pred_check_branch
                %171 = sbr.rel (0) target = $region51
              $region50: #{lenet_forward.4} parent=35 // pred_region
                loop: start=0, step=1, limit=1
                $region52: #{lenet_forward.4} parent=50 // loop_pre_header
                  _
                $region53: #{lenet_forward.4} parent=50 // loop_header
                  %s173 = sphi 0, %s177
                  %p174 = scmp.ge.s32.totalorder %s173, 1
                  %s178 = sphi %s138, %s138
                  %s179 = sphi %s134, %s134
                $region54: #{lenet_forward.4} parent=50 // loop_header_branch
                  %176 = sbr.rel (%p174) target = $region58
                $region55: #{lenet_forward.4} parent=50 // loop_body
                  %v180 = vld [vmem:[%s178] sm:$0xff]
                  %181 = vst [vmem:[%s179] sm:$0xff] %v180
                  %v182 = vld [vmem:[%s178 + $0x8] sm:$0xff]
                  %183 = vst [vmem:[%s179 + $0x8] sm:$0xff] %v182
                  %v184 = vld [vmem:[%s178 + $0x20] sm:$0xff]
                  %185 = vst [vmem:[%s179 + $0x10] sm:$0xff] %v184
                  %v186 = vld [vmem:[%s178 + $0x28] sm:$0xff]
                  %187 = vst [vmem:[%s179 + $0x18] sm:$0xff] %v186
                  %v188 = vld [vmem:[%s178 + $0x40] sm:$0xff]
                  %189 = vst [vmem:[%s179 + $0x20] sm:$0xff] %v188
                  %v190 = vld [vmem:[%s178 + $0x48] sm:$0xff]
                  %191 = vst [vmem:[%s179 + $0x28] sm:$0xff] %v190
                  %v192 = vld [vmem:[%s178 + $0x60] sm:$0xff]
                  %193 = vst [vmem:[%s179 + $0x30] sm:$0xff] %v192
                  %v194 = vld [vmem:[%s178 + $0x68] sm:$0xff]
                  %195 = vst [vmem:[%s179 + $0x38] sm:$0xff] %v194
                $region56: #{lenet_forward.4} parent=50 // loop_footer
                  %s177 = sadd.s32 1, %s173
                $region57: #{lenet_forward.4} parent=50 // loop_footer_branch
                  %172 = sbr.rel target = $region53
                $region58: #{lenet_forward.4} parent=50 // loop_exit
                  _
              $region51: #{lenet_forward.4} parent=35 // pred_fallthru
                _
              // Predicated region
              $region59: #{lenet_forward.4} parent=35 // pred_check
                _
              $region60: #{lenet_forward.4} parent=35 // pred_check_branch
                %197 = sbr.rel target = $region62
              $region61: #{lenet_forward.4} parent=35 // pred_region
                _
              $region62: #{lenet_forward.4} parent=35 // pred_fallthru
                _
            $region36: #{lenet_forward.4} parent=31 // pred_fallthru
              _
            // Predicated region
            $region37: #{lenet_forward.4} parent=31 // pred_check
              _
            $region38: #{lenet_forward.4} parent=31 // pred_check_branch
              %144 = sbr.rel target = $region40
            $region39: #{lenet_forward.4} parent=31 // pred_region
              loop: start=0, step=1, limit=1
              $region41: #{lenet_forward.4} parent=39 // loop_pre_header
                _
              $region42: #{lenet_forward.4} parent=39 // loop_header
                %s147 = sphi 0, %s151
                %p148 = scmp.ge.s32.totalorder %s147, 1
                %s152 = sphi %s138, %s138
                %s153 = sphi %s134, %s134
              $region43: #{lenet_forward.4} parent=39 // loop_header_branch
                %150 = sbr.rel (%p148) target = $region47
              $region44: #{lenet_forward.4} parent=39 // loop_body
                %v154 = vld [vmem:[%s152] sm:$0xff]
                %155 = vst [vmem:[%s153] sm:$0xff] %v154
                %v156 = vld [vmem:[%s152 + $0x8] sm:$0xff]
                %157 = vst [vmem:[%s153 + $0x8] sm:$0xff] %v156
                %v158 = vld [vmem:[%s152 + $0x20] sm:$0xff]
                %159 = vst [vmem:[%s153 + $0x10] sm:$0xff] %v158
                %v160 = vld [vmem:[%s152 + $0x28] sm:$0xff]
                %161 = vst [vmem:[%s153 + $0x18] sm:$0xff] %v160
                %v162 = vld [vmem:[%s152 + $0x40] sm:$0xff]
                %163 = vst [vmem:[%s153 + $0x20] sm:$0xff] %v162
                %v164 = vld [vmem:[%s152 + $0x48] sm:$0xff]
                %165 = vst [vmem:[%s153 + $0x28] sm:$0xff] %v164
                %v166 = vld [vmem:[%s152 + $0x60] sm:$0xff]
                %167 = vst [vmem:[%s153 + $0x30] sm:$0xff] %v166
                %v168 = vld [vmem:[%s152 + $0x68] sm:$0xff]
                %169 = vst [vmem:[%s153 + $0x38] sm:$0xff] %v168
              $region45: #{lenet_forward.4} parent=39 // loop_footer
                %s151 = sadd.s32 1, %s147
              $region46: #{lenet_forward.4} parent=39 // loop_footer_branch
                %146 = sbr.rel target = $region42
              $region47: #{lenet_forward.4} parent=39 // loop_exit
                _
            $region40: #{lenet_forward.4} parent=31 // pred_fallthru
              _
          $region32: #{lenet_forward.4} parent=27 // pred_fallthru
            _
          %198 = vnop
        $region28: #{lenet_forward.4} parent=23 // pred_fallthru
          _
      $region24: #{lenet_forward.4} parent=5 // pred_fallthru
        _
      %p199 = scmp.le.s32.totalorder 1, %s9
      %p200 = scmp.lt.s32.totalorder %s9, 3
      %p201 = pnand %p199, %p200
      %p202 = pneg %p201
      // Predicated region
      $region63: #{lenet_forward.4} parent=5 // pred_check
        _
      $region64: #{lenet_forward.4} parent=5 // pred_check_branch
        %204 = sbr.rel (%p201) target = $region66
      $region65: #{lenet_forward.4} parent=5 // pred_region
        %s205 = ssub.s32 %s9, 1
        %s206 = sand.u32 %s22, 1
        %s207 = sand.u32 %s22, 1
        %s208 = smul.addr %s207, 64
        %s209 = scalar_lea.vmem [#allocation2], %s208
        // Predicated region
        $region67: #{lenet_forward.4} parent=65 // pred_check
          %p210 = pneg %p35
        $region68: #{lenet_forward.4} parent=65 // pred_check_branch
          %212 = sbr.rel (%p210) target = $region70
        $region69: #{lenet_forward.4} parent=65 // pred_region
          _
        $region70: #{lenet_forward.4} parent=65 // pred_fallthru
          _
        %s213 = sand.u32 %s22, 1
        %s214 = sand.u32 %s22, 1
        %s215 = smul.addr %s214, 64
        %s216 = scalar_lea.vmem [#allocation2], %s215
        %p217 = pneg %p35
        %p218 = pneg %p32
        %p219 = pneg %p56
        %p220 = pneg %p53
        %p221 = pneg %p77
        %p222 = pneg %p74
        %p223 = pneg %p103
        %p224 = pneg %p100
        %s225 = smul.u32 2, %s14
        %p226 = scmp.lt.s32.totalorder %s225, 3
        %s227 = scalar_select %p226, %s225, 3
        %s228 = smul.addr %s227, 4
        %s229 = scalar_lea.vmem %s3, %s228
        %s230 = smul.u32 2, %s14
        %s231 = smul.u32 2, %s14
        %p232 = scmp.lt.s32.totalorder %s231, 3
        %s233 = scalar_select %p232, %s231, 3
        %s234 = smul.addr %s233, 4
        %s235 = scalar_lea.vmem %s3, %s234
        %s236 = smul.u32 2, %s14
        %v238 = vld [vmem:[%s1] sm:$0xf]
        %v239 = vld [vmem:[%s1 + $0x4] sm:$0xf]
        %v240 = vld [vmem:[%s1 + $0x8] sm:$0xf]
        %v241 = vld [vmem:[%s1 + $0xc] sm:$0xf]
        %v242 = vld [vmem:[%s1 + $0x10] sm:$0xf]
        %v243 = vld [vmem:[%s1 + $0x14] sm:$0xf]
        %v244 = vld [vmem:[%s1 + $0x18] sm:$0xf]
        %v245 = vld [vmem:[%s1 + $0x1c] sm:$0xf]
        %v246 = vld [vmem:[%s1 + $0x20] sm:$0xf]
        %v247 = vld [vmem:[%s1 + $0x24] sm:$0xf]
        %v248 = vld [vmem:[%s1 + $0x28] sm:$0xf]
        %v249 = vld [vmem:[%s1 + $0x2c] sm:$0xf]
        %v250 = vld [vmem:[%s1 + $0x30] sm:$0xf]
        %v251 = vld [vmem:[%s1 + $0x34] sm:$0xf]
        %v252 = vld [vmem:[%s1 + $0x38] sm:$0xf]
        %v253 = vld [vmem:[%s1 + $0x3c] sm:$0xf]
        %v254 = vld [vmem:[%s1 + $0x40] sm:$0xf]
        %v255 = vld [vmem:[%s1 + $0x44] sm:$0xf]
        %v256 = vld [vmem:[%s1 + $0x48] sm:$0x7]
        %v257 = vld [vmem:[%s209] sm:$0xff]
        %v258 = vld [vmem:[%s209 + $0x8] sm:$0xff]
        %v261 = vunpack.c.l.b16 %v257
        %v262 = vunpack.c.h.b16 %v257
        %v263 = vunpack.c.l.b16 %v258
        %v264 = vunpack.c.h.b16 %v258
        %v265 = vpack.c.b16 %v263, %v261
        %v266 = vpack.c.b16 %v264, %v262
        %v287 = vunpack.c.l.b16 %v238
        %v288 = vunpack.c.l.b16 %v239
        %v289 = vunpack.c.l.b16 %v240
        %v290 = vunpack.c.l.b16 %v241
        %v291 = vunpack.c.l.b16 %v242
        %v292 = vunpack.c.l.b16 %v243
        %v293 = vunpack.c.l.b16 %v244
        %v294 = vunpack.c.l.b16 %v245
        %v295 = vunpack.c.l.b16 %v246
        %v296 = vunpack.c.l.b16 %v247
        %v297 = vunpack.c.l.b16 %v248
        %v298 = vunpack.c.l.b16 %v249
        %v299 = vunpack.c.l.b16 %v250
        %v300 = vunpack.c.l.b16 %v251
        %v301 = vunpack.c.l.b16 %v252
        %v302 = vunpack.c.l.b16 %v253
        %v303 = vunpack.c.l.b16 %v254
        %v304 = vunpack.c.l.b16 %v255
        %v305 = vunpack.c.l.b16 %v256
        %v306 = vpack.c.b16 %v288, %v287
        %v307 = vpack.c.b16 %v290, %v289
        %v308 = vpack.c.b16 %v292, %v291
        %v309 = vpack.c.b16 %v294, %v293
        %v310 = vpack.c.b16 %v296, %v295
        %v311 = vpack.c.b16 %v298, %v297
        %v312 = vpack.c.b16 %v300, %v299
        %v313 = vpack.c.b16 %v302, %v301
        %v314 = vpack.c.b16 %v304, %v303
        %v315 = vpack.c.b16 %v305, %v305
        %vm325 = vcmask 179200
        %v327 = vsel %vm325, %v266, 0
        %vm329 = vcmask 1042432
        %v331 = vsel %vm329, %v315, 0
        %333 = vmatprep.subr.bf16.mxu0 0
        %334 = vmatpush1.bf16.msra.mxu0 %v306
        %335 = vmatprep.subr.bf16.mxu0 0
        %336 = vmatpush1.bf16.msra.mxu0 %v307
        %337 = vmatprep.subr.bf16.mxu0 0
        %338 = vmatpush1.bf16.msra.mxu0 %v308
        %339 = vmatprep.subr.bf16.mxu0 0
        %340 = vmatpush1.bf16.msra.mxu0 %v309
        %341 = vmatprep.subr.bf16.mxu0 0
        %342 = vmatpush1.bf16.msra.mxu0 %v310
        %343 = vmatprep.subr.bf16.mxu0 0
        %344 = vmatpush1.bf16.msra.mxu0 %v311
        %345 = vmatprep.subr.bf16.mxu0 0
        %346 = vmatpush1.bf16.msra.mxu0 %v312
        %347 = vmatprep.subr.bf16.mxu0 0
        %348 = vmatpush1.bf16.msra.mxu0 %v313
        %349 = vmatprep.subr.bf16.mxu0 0
        %350 = vmatpush1.bf16.msra.mxu0 %v314
        %351 = vmatprep.subr.bf16.mxu0 0
        %352 = vmatpush1.bf16.msra.mxu0 %v331
        %353 = vmatprep.subr.bf16.mxu0 0
        %354 = vmatpush1.bf16.msra.mxu0 0
        %355 = vmatprep.subr.bf16.mxu0 0
        %356 = vmatpush1.bf16.msra.mxu0 0
        %357 = vmatprep.subr.bf16.mxu0 0
        %358 = vmatpush1.bf16.msra.mxu0 0
        %359 = vmatprep.subr.bf16.mxu0 0
        %360 = vmatpush1.bf16.msra.mxu0 0
        %361 = vmatprep.subr.bf16.mxu0 0
        %362 = vmatpush1.bf16.msra.mxu0 0
        %363 = vmatprep.subr.bf16.mxu0 0
        %364 = vmatpush1.bf16.msra.mxu0 0
        %365 = vmatprep.mubr.bf16.mxu0 %v327
        %366 = vmatmul.mubr.bf16.gmra.mrb[0].mxu0 %v265
        %v367 = vpop.f32.mrb[0].mxu0
        %v368 = vadd.f32 0.0, %v367
        %v369 = vpop.f32.mrb[0].mxu0
        %v370 = vpop.f32.mrb[0].mxu0
        %v371 = vadd.f32 0.0, %v370
        %v372 = vpop.f32.mrb[0].mxu0
        %373 = vdwg.mxu0
        %s374 = scalar_lea.vmem %s209, 16 [#allocation2]
        %v375 = vld [vmem:[%s374] sm:$0xff]
        %v376 = vld [vmem:[%s374 + $0x8] sm:$0xff]
        %v379 = vunpack.c.l.b16 %v375
        %v380 = vunpack.c.h.b16 %v375
        %v381 = vunpack.c.l.b16 %v376
        %v382 = vunpack.c.h.b16 %v376
        %v383 = vpack.c.b16 %v381, %v379
        %v384 = vpack.c.b16 %v382, %v380
        %v387 = vsel %vm325, %v384, 0
        %389 = vmatprep.subr.bf16.mxu0 0
        %390 = vmatpush1.bf16.msra.mxu0 %v306
        %391 = vmatprep.subr.bf16.mxu0 0
        %392 = vmatpush1.bf16.msra.mxu0 %v307
        %393 = vmatprep.subr.bf16.mxu0 0
        %394 = vmatpush1.bf16.msra.mxu0 %v308
        %395 = vmatprep.subr.bf16.mxu0 0
        %396 = vmatpush1.bf16.msra.mxu0 %v309
        %397 = vmatprep.subr.bf16.mxu0 0
        %398 = vmatpush1.bf16.msra.mxu0 %v310
        %399 = vmatprep.subr.bf16.mxu0 0
        %400 = vmatpush1.bf16.msra.mxu0 %v311
        %401 = vmatprep.subr.bf16.mxu0 0
        %402 = vmatpush1.bf16.msra.mxu0 %v312
        %403 = vmatprep.subr.bf16.mxu0 0
        %404 = vmatpush1.bf16.msra.mxu0 %v313
        %405 = vmatprep.subr.bf16.mxu0 0
        %406 = vmatpush1.bf16.msra.mxu0 %v314
        %407 = vmatprep.subr.bf16.mxu0 0
        %408 = vmatpush1.bf16.msra.mxu0 %v331
        %409 = vmatprep.subr.bf16.mxu0 0
        %410 = vmatpush1.bf16.msra.mxu0 0
        %411 = vmatprep.subr.bf16.mxu0 0
        %412 = vmatpush1.bf16.msra.mxu0 0
        %413 = vmatprep.subr.bf16.mxu0 0
        %414 = vmatpush1.bf16.msra.mxu0 0
        %415 = vmatprep.subr.bf16.mxu0 0
        %416 = vmatpush1.bf16.msra.mxu0 0
        %417 = vmatprep.subr.bf16.mxu0 0
        %418 = vmatpush1.bf16.msra.mxu0 0
        %419 = vmatprep.subr.bf16.mxu0 0
        %420 = vmatpush1.bf16.msra.mxu0 0
        %421 = vmatprep.mubr.bf16.mxu0 %v387
        %422 = vmatmul.mubr.bf16.gmra.mrb[0].mxu0 %v383
        %v423 = vpop.f32.mrb[0].mxu0
        %v424 = vadd.f32 0.0, %v423
        %v425 = vpop.f32.mrb[0].mxu0
        %v426 = vpop.f32.mrb[0].mxu0
        %v427 = vadd.f32 0.0, %v426
        %v428 = vpop.f32.mrb[0].mxu0
        %429 = vdwg.mxu0
        %v430 = vmax.f32 %v368, %v424
        %v431 = vmax.f32 %v371, %v427
        %s432 = scalar_lea.vmem %s209, 32 [#allocation2]
        %v433 = vld [vmem:[%s432] sm:$0xff]
        %v434 = vld [vmem:[%s432 + $0x8] sm:$0xff]
        %v437 = vunpack.c.l.b16 %v433
        %v438 = vunpack.c.h.b16 %v433
        %v439 = vunpack.c.l.b16 %v434
        %v440 = vunpack.c.h.b16 %v434
        %v441 = vpack.c.b16 %v439, %v437
        %v442 = vpack.c.b16 %v440, %v438
        %v445 = vsel %vm325, %v442, 0
        %447 = vmatprep.subr.bf16.mxu0 0
        %448 = vmatpush1.bf16.msra.mxu0 %v306
        %449 = vmatprep.subr.bf16.mxu0 0
        %450 = vmatpush1.bf16.msra.mxu0 %v307
        %451 = vmatprep.subr.bf16.mxu0 0
        %452 = vmatpush1.bf16.msra.mxu0 %v308
        %453 = vmatprep.subr.bf16.mxu0 0
        %454 = vmatpush1.bf16.msra.mxu0 %v309
        %455 = vmatprep.subr.bf16.mxu0 0
        %456 = vmatpush1.bf16.msra.mxu0 %v310
        %457 = vmatprep.subr.bf16.mxu0 0
        %458 = vmatpush1.bf16.msra.mxu0 %v311
        %459 = vmatprep.subr.bf16.mxu0 0
        %460 = vmatpush1.bf16.msra.mxu0 %v312
        %461 = vmatprep.subr.bf16.mxu0 0
        %462 = vmatpush1.bf16.msra.mxu0 %v313
        %463 = vmatprep.subr.bf16.mxu0 0
        %464 = vmatpush1.bf16.msra.mxu0 %v314
        %465 = vmatprep.subr.bf16.mxu0 0
        %466 = vmatpush1.bf16.msra.mxu0 %v331
        %467 = vmatprep.subr.bf16.mxu0 0
        %468 = vmatpush1.bf16.msra.mxu0 0
        %469 = vmatprep.subr.bf16.mxu0 0
        %470 = vmatpush1.bf16.msra.mxu0 0
        %471 = vmatprep.subr.bf16.mxu0 0
        %472 = vmatpush1.bf16.msra.mxu0 0
        %473 = vmatprep.subr.bf16.mxu0 0
        %474 = vmatpush1.bf16.msra.mxu0 0
        %475 = vmatprep.subr.bf16.mxu0 0
        %476 = vmatpush1.bf16.msra.mxu0 0
        %477 = vmatprep.subr.bf16.mxu0 0
        %478 = vmatpush1.bf16.msra.mxu0 0
        %479 = vmatprep.mubr.bf16.mxu0 %v445
        %480 = vmatmul.mubr.bf16.gmra.mrb[0].mxu0 %v441
        %v481 = vpop.f32.mrb[0].mxu0
        %v482 = vadd.f32 0.0, %v481
        %v483 = vpop.f32.mrb[0].mxu0
        %v484 = vpop.f32.mrb[0].mxu0
        %v485 = vadd.f32 0.0, %v484
        %v486 = vpop.f32.mrb[0].mxu0
        %487 = vdwg.mxu0
        %v488 = vmax.f32 %v430, %v482
        %v489 = vmax.f32 %v431, %v485
        %s490 = scalar_lea.vmem %s209, 48 [#allocation2]
        %v491 = vld [vmem:[%s490] sm:$0xff]
        %v492 = vld [vmem:[%s490 + $0x8] sm:$0xff]
        %v495 = vunpack.c.l.b16 %v491
        %v496 = vunpack.c.h.b16 %v491
        %v497 = vunpack.c.l.b16 %v492
        %v498 = vunpack.c.h.b16 %v492
        %v499 = vpack.c.b16 %v497, %v495
        %v500 = vpack.c.b16 %v498, %v496
        %v503 = vsel %vm325, %v500, 0
        %505 = vmatprep.subr.bf16.mxu0 0
        %506 = vmatpush1.bf16.msra.mxu0 %v306
        %507 = vmatprep.subr.bf16.mxu0 0
        %508 = vmatpush1.bf16.msra.mxu0 %v307
        %509 = vmatprep.subr.bf16.mxu0 0
        %510 = vmatpush1.bf16.msra.mxu0 %v308
        %511 = vmatprep.subr.bf16.mxu0 0
        %512 = vmatpush1.bf16.msra.mxu0 %v309
        %513 = vmatprep.subr.bf16.mxu0 0
        %514 = vmatpush1.bf16.msra.mxu0 %v310
        %515 = vmatprep.subr.bf16.mxu0 0
        %516 = vmatpush1.bf16.msra.mxu0 %v311
        %517 = vmatprep.subr.bf16.mxu0 0
        %518 = vmatpush1.bf16.msra.mxu0 %v312
        %519 = vmatprep.subr.bf16.mxu0 0
        %520 = vmatpush1.bf16.msra.mxu0 %v313
        %521 = vmatprep.subr.bf16.mxu0 0
        %522 = vmatpush1.bf16.msra.mxu0 %v314
        %523 = vmatprep.subr.bf16.mxu0 0
        %524 = vmatpush1.bf16.msra.mxu0 %v331
        %525 = vmatprep.subr.bf16.mxu0 0
        %526 = vmatpush1.bf16.msra.mxu0 0
        %527 = vmatprep.subr.bf16.mxu0 0
        %528 = vmatpush1.bf16.msra.mxu0 0
        %529 = vmatprep.subr.bf16.mxu0 0
        %530 = vmatpush1.bf16.msra.mxu0 0
        %531 = vmatprep.subr.bf16.mxu0 0
        %532 = vmatpush1.bf16.msra.mxu0 0
        %533 = vmatprep.subr.bf16.mxu0 0
        %534 = vmatpush1.bf16.msra.mxu0 0
        %535 = vmatprep.subr.bf16.mxu0 0
        %536 = vmatpush1.bf16.msra.mxu0 0
        %537 = vmatprep.mubr.bf16.mxu0 %v503
        %538 = vmatmul.mubr.bf16.gmra.mrb[0].mxu0 %v499
        %v539 = vpop.f32.mrb[0].mxu0
        %v540 = vadd.f32 0.0, %v539
        %v541 = vpop.f32.mrb[0].mxu0
        %v542 = vpop.f32.mrb[0].mxu0
        %v543 = vadd.f32 0.0, %v542
        %v544 = vpop.f32.mrb[0].mxu0
        %545 = vdwg.mxu0
        %v546 = vmax.f32 %v488, %v540
        %v547 = vmax.f32 %v489, %v543
        %v548 = vld [vmem:[%s2] sm:$0x1]
        %v550 = vlaneseq
        %v551 = vshrl.u32 %v550, 7
        %v552 = vsub.s32 0, %v551
        %v553 = vrot.slane %v548, %v552
        %v555 = vadd.f32 %v546, %v553
        %v556 = vadd.f32 %v547, %v553
        %v557 = vmax.f32 %v555, 0.0
        %v558 = vmax.f32 %v556, 0.0
        %v559 = vpack.c.bf16 %v558, %v557
        %v561 = vunpack.c.l.b16 %v559
        %v562 = vunpack.c.h.b16 %v559
        %v563 = vpack.c.b16 %v561, %v561
        %v564 = vpack.c.b16 %v562, %v562
        %vm567 = vcmask 125952
        %568 = vst.msk [vmem:[%s235] sm:$0xf] %vm567, %v563
        %569 = vst.msk [vmem:[%s235 + $0x4] sm:$0xf] %vm567, %v564
        %s570 = smul.u32 2, %s14
        %p571 = scmp.lt.s32.totalorder %s570, 3
        %s572 = scalar_select %p571, %s570, 3
        %s573 = smul.addr %s572, 4
        %s574 = scalar_lea.vmem %s3, %s573
        // Predicated region
        $region71: #{lenet_forward.4} parent=65 // pred_check
          %p575 = pneg %p100
        $region72: #{lenet_forward.4} parent=65 // pred_check_branch
          %577 = sbr.rel (%p575) target = $region74
        $region73: #{lenet_forward.4} parent=65 // pred_region
          %s578 = smul.u32 2, %s14
        $region74: #{lenet_forward.4} parent=65 // pred_fallthru
          _
      $region66: #{lenet_forward.4} parent=5 // pred_fallthru
        _
      %p579 = scmp.le.s32.totalorder 2, %s9
      // Predicated region
      $region75: #{lenet_forward.4} parent=5 // pred_check
        %p580 = pneg %p579
      $region76: #{lenet_forward.4} parent=5 // pred_check_branch
        %582 = sbr.rel (%p580) target = $region78
      $region77: #{lenet_forward.4} parent=5 // pred_region
        %s583 = ssub.s32 %s9, 2
        // Predicated region
        $region79: #{lenet_forward.4} parent=77 // pred_check
          %p584 = pneg %p106
        $region80: #{lenet_forward.4} parent=77 // pred_check_branch
          %586 = sbr.rel (%p584) target = $region82
        $region81: #{lenet_forward.4} parent=77 // pred_region
          %s587 = smul.u32 2, %s15
          %p588 = scmp.lt.s32.totalorder %s587, 3
          %s589 = scalar_select %p588, %s587, 3
          %s590 = smul.addr %s589, 4
          %s591 = scalar_lea.vmem %s3, %s590
        $region82: #{lenet_forward.4} parent=77 // pred_fallthru
          _
      $region78: #{lenet_forward.4} parent=5 // pred_fallthru
        _
    $region6: #{lenet_forward.4} parent=1 // loop_footer
      %s13 = sadd.s32 1, %s9
    $region7: #{lenet_forward.4} parent=1 // loop_footer_branch
      %8 = sbr.rel target = $region3
    $region8: #{lenet_forward.4} parent=1 // loop_exit
      _

// kernel: lenet_forward.5
$region0: #{lenet_forward.5}
  #allocation0 [shape = 'u32[]', space=smem, size = 0x4, offset = 0x4, fixed_abs, tag = 'smem constant byte address 0x4 - core index']
  #allocation1 [shape = 'u32[144,128]{1,0:T(1,128)}', space=vmem, size = 0x12000, scoped, tag = 'internal scratch']
  %s0 = inlined_call_operand.vmem [shape: bf16[16,256], index: 0, kind: input, shape index: {}]
  %s1 = inlined_call_operand.vmem [shape: bf16[256,120], index: 1, kind: input, shape index: {}]
  %s2 = inlined_call_operand.vmem [shape: f32[1,120], index: 2, kind: input, shape index: {}]
  %s3 = inlined_call_operand.vmem [shape: bf16[120,84], index: 3, kind: input, shape index: {}]
  %s4 = inlined_call_operand.vmem [shape: f32[1,84], index: 4, kind: input, shape index: {}]
  %s5 = inlined_call_operand.vmem [shape: bf16[84,10], index: 5, kind: input, shape index: {}]
  %s6 = inlined_call_operand.vmem [shape: f32[1,10], index: 6, kind: input, shape index: {}]
  %s7 = inlined_call_operand.vmem [shape: f32[16,10], index: 7, kind: output, shape index: {}]
  %s8 = sld [smem:[#allocation0]]
  $region38: #{lenet_forward.5} parent=0
    _
  %s10 = ssub.s32 1, %s8
  %s11 = scalar_select 0, %s10, %s8
  // Predicated region
  $region2: #{lenet_forward.5} parent=0 // pred_check
    _
  $region3: #{lenet_forward.5} parent=0 // pred_check_branch
    %13 = sbr.rel (0) target = $region5
  $region4: #{lenet_forward.5} parent=0 // pred_region
    _
  $region5: #{lenet_forward.5} parent=0 // pred_fallthru
    _
  // Predicated region
  $region6: #{lenet_forward.5} parent=0 // pred_check
    _
  $region7: #{lenet_forward.5} parent=0 // pred_check_branch
    %15 = sbr.rel (0) target = $region9
  $region8: #{lenet_forward.5} parent=0 // pred_region
    _
  $region9: #{lenet_forward.5} parent=0 // pred_fallthru
    _
  // Predicated region
  $region10: #{lenet_forward.5} parent=0 // pred_check
    _
  $region11: #{lenet_forward.5} parent=0 // pred_check_branch
    %17 = sbr.rel (0) target = $region13
  $region12: #{lenet_forward.5} parent=0 // pred_region
    _
  $region13: #{lenet_forward.5} parent=0 // pred_fallthru
    _
  // Predicated region
  $region14: #{lenet_forward.5} parent=0 // pred_check
    _
  $region15: #{lenet_forward.5} parent=0 // pred_check_branch
    %19 = sbr.rel (0) target = $region17
  $region16: #{lenet_forward.5} parent=0 // pred_region
    _
  $region17: #{lenet_forward.5} parent=0 // pred_fallthru
    _
  // Predicated region
  $region18: #{lenet_forward.5} parent=0 // pred_check
    _
  $region19: #{lenet_forward.5} parent=0 // pred_check_branch
    %21 = sbr.rel (0) target = $region21
  $region20: #{lenet_forward.5} parent=0 // pred_region
    _
  $region21: #{lenet_forward.5} parent=0 // pred_fallthru
    _
  // Predicated region
  $region22: #{lenet_forward.5} parent=0 // pred_check
    _
  $region23: #{lenet_forward.5} parent=0 // pred_check_branch
    %23 = sbr.rel (0) target = $region25
  $region24: #{lenet_forward.5} parent=0 // pred_region
    _
  $region25: #{lenet_forward.5} parent=0 // pred_fallthru
    _
  // Predicated region
  $region26: #{lenet_forward.5} parent=0 // pred_check
    _
  $region27: #{lenet_forward.5} parent=0 // pred_check_branch
    %25 = sbr.rel (0) target = $region29
  $region28: #{lenet_forward.5} parent=0 // pred_region
    _
  $region29: #{lenet_forward.5} parent=0 // pred_fallthru
    _
  %v27 = vld [vmem:[%s0] sm:$0xff]
  %v28 = vld [vmem:[%s0 + $0x8] sm:$0xff]
  %v29 = vld [vmem:[%s1] sm:$0xf]
  %v30 = vld [vmem:[%s1 + $0x4] sm:$0xf]
  %v31 = vld [vmem:[%s1 + $0x8] sm:$0xf]
  %v32 = vld [vmem:[%s1 + $0xc] sm:$0xf]
  %v33 = vld [vmem:[%s1 + $0x10] sm:$0xf]
  %v34 = vld [vmem:[%s1 + $0x14] sm:$0xf]
  %v35 = vld [vmem:[%s1 + $0x18] sm:$0xf]
  %v36 = vld [vmem:[%s1 + $0x1c] sm:$0xf]
  %v37 = vld [vmem:[%s1 + $0x20] sm:$0xf]
  %v38 = vld [vmem:[%s1 + $0x24] sm:$0xf]
  %v39 = vld [vmem:[%s1 + $0x28] sm:$0xf]
  %v40 = vld [vmem:[%s1 + $0x2c] sm:$0xf]
  %v41 = vld [vmem:[%s1 + $0x30] sm:$0xf]
  %v42 = vld [vmem:[%s1 + $0x34] sm:$0xf]
  %v43 = vld [vmem:[%s1 + $0x38] sm:$0xf]
  %v44 = vld [vmem:[%s1 + $0x3c] sm:$0xf]
  %v45 = vld [vmem:[%s1 + $0x40] sm:$0xf]
  %v46 = vld [vmem:[%s1 + $0x44] sm:$0xf]
  %v47 = vld [vmem:[%s1 + $0x48] sm:$0xf]
  %v48 = vld [vmem:[%s1 + $0x4c] sm:$0xf]
  %v49 = vld [vmem:[%s1 + $0x50] sm:$0xf]
  %v50 = vld [vmem:[%s1 + $0x54] sm:$0xf]
  %v51 = vld [vmem:[%s1 + $0x58] sm:$0xf]
  %v52 = vld [vmem:[%s1 + $0x5c] sm:$0xf]
  %v53 = vld [vmem:[%s1 + $0x60] sm:$0xf]
  %v54 = vld [vmem:[%s1 + $0x64] sm:$0xf]
  %v55 = vld [vmem:[%s1 + $0x68] sm:$0xf]
  %v56 = vld [vmem:[%s1 + $0x6c] sm:$0xf]
  %v57 = vld [vmem:[%s1 + $0x70] sm:$0xf]
  %v58 = vld [vmem:[%s1 + $0x74] sm:$0xf]
  %v59 = vld [vmem:[%s1 + $0x78] sm:$0xf]
  %v60 = vld [vmem:[%s1 + $0x7c] sm:$0xf]
  %v61 = vld [vmem:[%s2] sm:$0x1]
  %v63 = vlaneseq
  %v64 = vshrl.u32 %v63, 7
  %v65 = vsub.s32 0, %v64
  %v66 = vrot.slane %v61, %v65
  %v70 = vunpack.c.l.b16 %v27
  %v71 = vunpack.c.h.b16 %v27
  %v72 = vunpack.c.l.b16 %v28
  %v73 = vunpack.c.h.b16 %v28
  %v74 = vpack.c.b16 %v72, %v70
  %v75 = vpack.c.b16 %v73, %v71
  %v110 = vunpack.c.l.b16 %v29
  %v111 = vunpack.c.l.b16 %v30
  %v112 = vunpack.c.l.b16 %v31
  %v113 = vunpack.c.l.b16 %v32
  %v114 = vunpack.c.l.b16 %v33
  %v115 = vunpack.c.l.b16 %v34
  %v116 = vunpack.c.l.b16 %v35
  %v117 = vunpack.c.l.b16 %v36
  %v118 = vunpack.c.l.b16 %v37
  %v119 = vunpack.c.l.b16 %v38
  %v120 = vunpack.c.l.b16 %v39
  %v121 = vunpack.c.l.b16 %v40
  %v122 = vunpack.c.l.b16 %v41
  %v123 = vunpack.c.l.b16 %v42
  %v124 = vunpack.c.l.b16 %v43
  %v125 = vunpack.c.l.b16 %v44
  %v126 = vunpack.c.l.b16 %v45
  %v127 = vunpack.c.l.b16 %v46
  %v128 = vunpack.c.l.b16 %v47
  %v129 = vunpack.c.l.b16 %v48
  %v130 = vunpack.c.l.b16 %v49
  %v131 = vunpack.c.l.b16 %v50
  %v132 = vunpack.c.l.b16 %v51
  %v133 = vunpack.c.l.b16 %v52
  %v134 = vunpack.c.l.b16 %v53
  %v135 = vunpack.c.l.b16 %v54
  %v136 = vunpack.c.l.b16 %v55
  %v137 = vunpack.c.l.b16 %v56
  %v138 = vunpack.c.l.b16 %v57
  %v139 = vunpack.c.l.b16 %v58
  %v140 = vunpack.c.l.b16 %v59
  %v141 = vunpack.c.l.b16 %v60
  %v142 = vpack.c.b16 %v111, %v110
  %v143 = vpack.c.b16 %v113, %v112
  %v144 = vpack.c.b16 %v115, %v114
  %v145 = vpack.c.b16 %v117, %v116
  %v146 = vpack.c.b16 %v119, %v118
  %v147 = vpack.c.b16 %v121, %v120
  %v148 = vpack.c.b16 %v123, %v122
  %v149 = vpack.c.b16 %v125, %v124
  %v150 = vpack.c.b16 %v127, %v126
  %v151 = vpack.c.b16 %v129, %v128
  %v152 = vpack.c.b16 %v131, %v130
  %v153 = vpack.c.b16 %v133, %v132
  %v154 = vpack.c.b16 %v135, %v134
  %v155 = vpack.c.b16 %v137, %v136
  %v156 = vpack.c.b16 %v139, %v138
  %v157 = vpack.c.b16 %v141, %v140
  %174 = vmatprep.subr.bf16.mxu0 0
  %175 = vmatpush1.bf16.msra.mxu0 %v142
  %176 = vmatprep.subr.bf16.mxu0 0
  %177 = vmatpush1.bf16.msra.mxu0 %v143
  %178 = vmatprep.subr.bf16.mxu0 0
  %179 = vmatpush1.bf16.msra.mxu0 %v144
  %180 = vmatprep.subr.bf16.mxu0 0
  %181 = vmatpush1.bf16.msra.mxu0 %v145
  %182 = vmatprep.subr.bf16.mxu0 0
  %183 = vmatpush1.bf16.msra.mxu0 %v146
  %184 = vmatprep.subr.bf16.mxu0 0
  %185 = vmatpush1.bf16.msra.mxu0 %v147
  %186 = vmatprep.subr.bf16.mxu0 0
  %187 = vmatpush1.bf16.msra.mxu0 %v148
  %188 = vmatprep.subr.bf16.mxu0 0
  %189 = vmatpush1.bf16.msra.mxu0 %v149
  %190 = vmatprep.subr.bf16.mxu0 0
  %191 = vmatpush1.bf16.msra.mxu0 %v150
  %192 = vmatprep.subr.bf16.mxu0 0
  %193 = vmatpush1.bf16.msra.mxu0 %v151
  %194 = vmatprep.subr.bf16.mxu0 0
  %195 = vmatpush1.bf16.msra.mxu0 %v152
  %196 = vmatprep.subr.bf16.mxu0 0
  %197 = vmatpush1.bf16.msra.mxu0 %v153
  %198 = vmatprep.subr.bf16.mxu0 0
  %199 = vmatpush1.bf16.msra.mxu0 %v154
  %200 = vmatprep.subr.bf16.mxu0 0
  %201 = vmatpush1.bf16.msra.mxu0 %v155
  %202 = vmatprep.subr.bf16.mxu0 0
  %203 = vmatpush1.bf16.msra.mxu0 %v156
  %204 = vmatprep.subr.bf16.mxu0 0
  %205 = vmatpush1.bf16.msra.mxu0 %v157
  %206 = vmatprep.mubr.bf16.mxu0 %v75
  %207 = vmatmul.mubr.bf16.gmra.mrb[0].mxu0 %v74
  %v208 = vpop.f32.mrb[0].mxu0
  %v209 = vadd.f32 %v66, %v208
  %v210 = vpop.f32.mrb[0].mxu0
  %v211 = vpop.f32.mrb[0].mxu0
  %v212 = vadd.f32 %v66, %v211
  %v213 = vpop.f32.mrb[0].mxu0
  %214 = vdwg.mxu0
  %v215 = vmax.f32 %v209, 0.0
  %v216 = vmax.f32 %v212, 0.0
  %v217 = vpack.c.bf16 %v216, %v215
  %v218 = vld [vmem:[%s3] sm:$0xf]
  %v219 = vld [vmem:[%s3 + $0x4] sm:$0xf]
  %v220 = vld [vmem:[%s3 + $0x8] sm:$0xf]
  %v221 = vld [vmem:[%s3 + $0xc] sm:$0xf]
  %v222 = vld [vmem:[%s3 + $0x10] sm:$0xf]
  %v223 = vld [vmem:[%s3 + $0x14] sm:$0xf]
  %v224 = vld [vmem:[%s3 + $0x18] sm:$0xf]
  %v225 = vld [vmem:[%s3 + $0x1c] sm:$0xf]
  %v226 = vld [vmem:[%s3 + $0x20] sm:$0xf]
  %v227 = vld [vmem:[%s3 + $0x24] sm:$0xf]
  %v228 = vld [vmem:[%s3 + $0x28] sm:$0xf]
  %v229 = vld [vmem:[%s3 + $0x2c] sm:$0xf]
  %v230 = vld [vmem:[%s3 + $0x30] sm:$0xf]
  %v231 = vld [vmem:[%s3 + $0x34] sm:$0xf]
  %v232 = vld [vmem:[%s3 + $0x38] sm:$0xf]
  %v233 = vld [vmem:[%s4] sm:$0x1]
  %v235 = vlaneseq
  %v236 = vshrl.u32 %v235, 7
  %v237 = vsub.s32 0, %v236
  %v238 = vrot.slane %v233, %v237
  %v255 = vunpack.c.l.b16 %v218
  %v256 = vunpack.c.l.b16 %v219
  %v257 = vunpack.c.l.b16 %v220
  %v258 = vunpack.c.l.b16 %v221
  %v259 = vunpack.c.l.b16 %v222
  %v260 = vunpack.c.l.b16 %v223
  %v261 = vunpack.c.l.b16 %v224
  %v262 = vunpack.c.l.b16 %v225
  %v263 = vunpack.c.l.b16 %v226
  %v264 = vunpack.c.l.b16 %v227
  %v265 = vunpack.c.l.b16 %v228
  %v266 = vunpack.c.l.b16 %v229
  %v267 = vunpack.c.l.b16 %v230
  %v268 = vunpack.c.l.b16 %v231
  %v269 = vunpack.c.l.b16 %v232
  %v270 = vpack.c.b16 %v256, %v255
  %v271 = vpack.c.b16 %v258, %v257
  %v272 = vpack.c.b16 %v260, %v259
  %v273 = vpack.c.b16 %v262, %v261
  %v274 = vpack.c.b16 %v264, %v263
  %v275 = vpack.c.b16 %v266, %v265
  %v276 = vpack.c.b16 %v268, %v267
  %v277 = vpack.c.b16 %v269, %v269
  %vm285 = vcmask 982016
  %v287 = vsel %vm285, %v217, 0
  %vm289 = vcmask 1043456
  %v291 = vsel %vm289, %v277, 0
  %293 = vmatprep.subr.bf16.mxu0 0
  %294 = vmatpush1.bf16.msra.mxu0 %v270
  %295 = vmatprep.subr.bf16.mxu0 0
  %296 = vmatpush1.bf16.msra.mxu0 %v271
  %297 = vmatprep.subr.bf16.mxu0 0
  %298 = vmatpush1.bf16.msra.mxu0 %v272
  %299 = vmatprep.subr.bf16.mxu0 0
  %300 = vmatpush1.bf16.msra.mxu0 %v273
  %301 = vmatprep.subr.bf16.mxu0 0
  %302 = vmatpush1.bf16.msra.mxu0 %v274
  %303 = vmatprep.subr.bf16.mxu0 0
  %304 = vmatpush1.bf16.msra.mxu0 %v275
  %305 = vmatprep.subr.bf16.mxu0 0
  %306 = vmatpush1.bf16.msra.mxu0 %v276
  %307 = vmatprep.subr.bf16.mxu0 0
  %308 = vmatpush1.bf16.msra.mxu0 %v291
  %309 = vmatprep.subr.bf16.mxu0 0
  %310 = vmatpush1.bf16.msra.mxu0 0
  %311 = vmatprep.subr.bf16.mxu0 0
  %312 = vmatpush1.bf16.msra.mxu0 0
  %313 = vmatprep.subr.bf16.mxu0 0
  %314 = vmatpush1.bf16.msra.mxu0 0
  %315 = vmatprep.subr.bf16.mxu0 0
  %316 = vmatpush1.bf16.msra.mxu0 0
  %317 = vmatprep.subr.bf16.mxu0 0
  %318 = vmatpush1.bf16.msra.mxu0 0
  %319 = vmatprep.subr.bf16.mxu0 0
  %320 = vmatpush1.bf16.msra.mxu0 0
  %321 = vmatprep.subr.bf16.mxu0 0
  %322 = vmatpush1.bf16.msra.mxu0 0
  %323 = vmatprep.subr.bf16.mxu0 0
  %324 = vmatpush1.bf16.msra.mxu0 0
  %325 = vmatprep.mubr.bf16.mxu0 0
  %326 = vmatmul.mubr.bf16.gmra.mrb[0].mxu0 %v287
  %v327 = vpop.f32.mrb[0].mxu0
  %v328 = vadd.f32 %v238, %v327
  %v329 = vpop.f32.mrb[0].mxu0
  %v330 = vpop.f32.mrb[0].mxu0
  %v331 = vadd.f32 %v238, %v330
  %v332 = vpop.f32.mrb[0].mxu0
  %333 = vdwg.mxu0
  %v334 = vmax.f32 %v328, 0.0
  %v335 = vmax.f32 %v331, 0.0
  %v336 = vpack.c.bf16 %v335, %v334
  %v337 = vld [vmem:[%s5] sm:$0xf]
  %v338 = vld [vmem:[%s5 + $0x4] sm:$0xf]
  %v339 = vld [vmem:[%s5 + $0x8] sm:$0xf]
  %v340 = vld [vmem:[%s5 + $0xc] sm:$0xf]
  %v341 = vld [vmem:[%s5 + $0x10] sm:$0xf]
  %v342 = vld [vmem:[%s5 + $0x14] sm:$0xf]
  %v343 = vld [vmem:[%s5 + $0x18] sm:$0xf]
  %v344 = vld [vmem:[%s5 + $0x1c] sm:$0xf]
  %v345 = vld [vmem:[%s5 + $0x20] sm:$0xf]
  %v346 = vld [vmem:[%s5 + $0x24] sm:$0xf]
  %v347 = vld [vmem:[%s5 + $0x28] sm:$0x3]
  %v348 = vld [vmem:[%s6] sm:$0x1]
  %v350 = vlaneseq
  %v351 = vshrl.u32 %v350, 7
  %v352 = vsub.s32 0, %v351
  %v353 = vrot.slane %v348, %v352
  %v366 = vunpack.c.l.b16 %v337
  %v367 = vunpack.c.l.b16 %v338
  %v368 = vunpack.c.l.b16 %v339
  %v369 = vunpack.c.l.b16 %v340
  %v370 = vunpack.c.l.b16 %v341
  %v371 = vunpack.c.l.b16 %v342
  %v372 = vunpack.c.l.b16 %v343
  %v373 = vunpack.c.l.b16 %v344
  %v374 = vunpack.c.l.b16 %v345
  %v375 = vunpack.c.l.b16 %v346
  %v376 = vunpack.c.l.b16 %v347
  %v377 = vpack.c.b16 %v367, %v366
  %v378 = vpack.c.b16 %v369, %v368
  %v379 = vpack.c.b16 %v371, %v370
  %v380 = vpack.c.b16 %v373, %v372
  %v381 = vpack.c.b16 %v375, %v374
  %v382 = vpack.c.b16 %v376, %v376
  %vm388 = vcmask 687104
  %v390 = vsel %vm388, %v336, 0
  %vm392 = vcmask 1041408
  %v394 = vsel %vm392, %v382, 0
  %396 = vmatprep.subr.bf16.mxu0 0
  %397 = vmatpush1.bf16.msra.mxu0 %v377
  %398 = vmatprep.subr.bf16.mxu0 0
  %399 = vmatpush1.bf16.msra.mxu0 %v378
  %400 = vmatprep.subr.bf16.mxu0 0
  %401 = vmatpush1.bf16.msra.mxu0 %v379
  %402 = vmatprep.subr.bf16.mxu0 0
  %403 = vmatpush1.bf16.msra.mxu0 %v380
  %404 = vmatprep.subr.bf16.mxu0 0
  %405 = vmatpush1.bf16.msra.mxu0 %v381
  %406 = vmatprep.subr.bf16.mxu0 0
  %407 = vmatpush1.bf16.msra.mxu0 %v394
  %408 = vmatprep.subr.bf16.mxu0 0
  %409 = vmatpush1.bf16.msra.mxu0 0
  %410 = vmatprep.subr.bf16.mxu0 0
  %411 = vmatpush1.bf16.msra.mxu0 0
  %412 = vmatprep.subr.bf16.mxu0 0
  %413 = vmatpush1.bf16.msra.mxu0 0
  %414 = vmatprep.subr.bf16.mxu0 0
  %415 = vmatpush1.bf16.msra.mxu0 0
  %416 = vmatprep.subr.bf16.mxu0 0
  %417 = vmatpush1.bf16.msra.mxu0 0
  %418 = vmatprep.subr.bf16.mxu0 0
  %419 = vmatpush1.bf16.msra.mxu0 0
  %420 = vmatprep.subr.bf16.mxu0 0
  %421 = vmatpush1.bf16.msra.mxu0 0
  %422 = vmatprep.subr.bf16.mxu0 0
  %423 = vmatpush1.bf16.msra.mxu0 0
  %424 = vmatprep.subr.bf16.mxu0 0
  %425 = vmatpush1.bf16.msra.mxu0 0
  %426 = vmatprep.subr.bf16.mxu0 0
  %427 = vmatpush1.bf16.msra.mxu0 0
  %428 = vmatprep.mubr.bf16.mxu0 0
  %429 = vmatmul.mubr.bf16.gmra.mrb[0].mxu0 %v390
  %v430 = vpop.f32.mrb[0].mxu0
  %v431 = vadd.f32 %v353, %v430
  %v432 = vpop.f32.mrb[0].mxu0
  %v433 = vpop.f32.mrb[0].mxu0
  %v434 = vadd.f32 %v353, %v433
  %v435 = vpop.f32.mrb[0].mxu0
  %436 = vdwg.mxu0
  %vm437 = vcmask 80896
  %438 = vst.msk [vmem:[%s7] sm:$0xff] %vm437, %v431
  %439 = vst.msk [vmem:[%s7 + $0x8] sm:$0xff] %vm437, %v434
  // Predicated region
  $region30: #{lenet_forward.5} parent=0 // pred_check
    _
  $region31: #{lenet_forward.5} parent=0 // pred_check_branch
    %441 = sbr.rel (0) target = $region33
  $region32: #{lenet_forward.5} parent=0 // pred_region
    _
  $region33: #{lenet_forward.5} parent=0 // pred_fallthru
    _
  // Predicated region
  $region34: #{lenet_forward.5} parent=0 // pred_check
    _
  $region35: #{lenet_forward.5} parent=0 // pred_check_branch
    %443 = sbr.rel (0) target = $region37
  $region36: #{lenet_forward.5} parent=0 // pred_region
    _
  $region37: #{lenet_forward.5} parent=0 // pred_fallthru
    _

</llo_original>
